<compile_context>
chip_gen: v5e
topology: v5e:2x2
jax: 0.10.0
libtpu: 0.0.40
codegen_flags: <defaults>
</compile_context>

<pallas_src>
import math
import functools
import numpy as np
import jax
import jax.numpy as jnp
from jax.experimental import pallas as pl
from jax.experimental.pallas import tpu as pltpu

EPS = 1e-6
VMEM_LIMIT = 32 * 1024 * 1024        # explicit scoped-VMEM budget (fits v5e/v6e/v7x)


# ---------------------------------------------------------------------------
# Tiling helpers (respect the (8, 128) block constraints)
# ---------------------------------------------------------------------------
def _tile_sub(dim, target):
    """Second-to-last (sublane) tile: divisor of dim that is a multiple of 8,
    else any divisor, else the full dim."""
    if dim <= target:
        return dim
    t = target - (target % 8)
    while t >= 8:
        if dim % t == 0:
            return t
        t -= 8
    for t in range(target, 0, -1):
        if dim % t == 0:
            return t
    return dim


def _tile_lane(dim, target):
    """Last (lane) tile: divisor of dim that is a multiple of 128, else the
    full dim (always legal)."""
    if dim <= target:
        return dim
    t = (target // 128) * 128
    while t >= 128:
        if dim % t == 0:
            return t
        t -= 128
    return dim


def _cparams(n_par, n_arb=0):
    return pltpu.CompilerParams(
        dimension_semantics=("parallel",) * n_par + ("arbitrary",) * n_arb,
        vmem_limit_bytes=VMEM_LIMIT)


def _gelu(x):
    cdf = 0.5 * (1.0 + jnp.tanh(np.sqrt(2.0 / np.pi) * (x + 0.044715 * x ** 3)))
    return x * cdf


def _torch_layernorm(s, g, b, eps):
    # torch.Tensor.std is Bessel-corrected (divide by N-1); eps added to std.
    mean = jnp.mean(s, axis=-1, keepdims=True)
    d = s - mean
    var = jnp.sum(d * d, axis=-1, keepdims=True) / (s.shape[-1] - 1)
    return g * d / (jnp.sqrt(var) + eps) + b


# ---------------------------------------------------------------------------
# Linear (+ optional activation).  K (contraction) kept whole: for BERT-sized
# E the full-K weight block is small, the grid stays fully parallel and there
# is no accumulator init/finalize overhead.
# ---------------------------------------------------------------------------
def _linear_kernel(x_ref, w_ref, b_ref, o_ref, *, act):
    y = jnp.dot(x_ref[...].astype(jnp.bfloat16), w_ref[...].astype(jnp.bfloat16),
                preferred_element_type=jnp.float32) + b_ref[...]
    if act == "gelu":
        y = _gelu(y)
    elif act == "tanh":
        y = jnp.tanh(y)
    o_ref[...] = y.astype(o_ref.dtype)


def linear_act(x, w, b, act="none", out_dtype=jnp.bfloat16, tm=256, tn=512):
    M, K = x.shape
    N = w.shape[1]
    tm, tn = _tile_sub(M, tm), _tile_lane(N, tn)
    return pl.pallas_call(
        functools.partial(_linear_kernel, act=act),
        out_shape=jax.ShapeDtypeStruct((M, N), out_dtype),
        grid=(M // tm, N // tn),
        in_specs=[
            pl.BlockSpec((tm, K), lambda i, j: (i, 0)),
            pl.BlockSpec((K, tn), lambda i, j: (0, j)),
            pl.BlockSpec((1, tn), lambda i, j: (0, j)),
        ],
        out_specs=pl.BlockSpec((tm, tn), lambda i, j: (i, j)),
        compiler_params=_cparams(2),
    )(x, w, b.reshape(1, N))


# ---------------------------------------------------------------------------
# Linear fused with residual-add + LayerNorm epilogue.
# N (= hidden) is kept whole so the LN row reduction stays in one block.
# K is tiled only when large (the F -> E projection); E-sized K goes through
# a single-step, fully-parallel kernel.
# ---------------------------------------------------------------------------
def _linear_addln_kernel(x_ref, w_ref, b_ref, r_ref, g_ref, bb_ref, o_ref, *, eps):
    y = jnp.dot(x_ref[...].astype(jnp.bfloat16), w_ref[...].astype(jnp.bfloat16),
                preferred_element_type=jnp.float32)
    s = r_ref[...].astype(jnp.float32) + y + b_ref[...]
    o_ref[...] = _torch_layernorm(s, g_ref[...], bb_ref[...], eps).astype(o_ref.dtype)


def _linear_addln_acc_kernel(x_ref, w_ref, b_ref, r_ref, g_ref, bb_ref, o_ref,
                             acc_ref, *, eps):
    @pl.when(pl.program_id(1) == 0)
    def _init():
        acc_ref[...] = jnp.zeros_like(acc_ref)

    acc_ref[...] += jnp.dot(x_ref[...].astype(jnp.bfloat16),
                            w_ref[...].astype(jnp.bfloat16),
                            preferred_element_type=jnp.float32)

    @pl.when(pl.program_id(1) == pl.num_programs(1) - 1)
    def _finalize():
        s = r_ref[...].astype(jnp.float32) + acc_ref[...] + b_ref[...]
        o_ref[...] = _torch_layernorm(s, g_ref[...], bb_ref[...], eps
                                      ).astype(o_ref.dtype)


def linear_add_ln(x, w, b, residual, g, beta, eps=EPS,
                  out_dtype=jnp.bfloat16, tm=256, tk=1024):
    M, K = x.shape
    N = w.shape[1]
    tm = _tile_sub(M, tm)
    tk = _tile_lane(K, tk)
    args = (x, w, b.reshape(1, N), residual, g.reshape(1, N), beta.reshape(1, N))
    if tk >= K:                                     # single K step, fully parallel
        return pl.pallas_call(
            functools.partial(_linear_addln_kernel, eps=eps),
            out_shape=jax.ShapeDtypeStruct((M, N), out_dtype),
            grid=(M // tm,),
            in_specs=[
                pl.BlockSpec((tm, K), lambda i: (i, 0)),
                pl.BlockSpec((K, N), lambda i: (0, 0)),
                pl.BlockSpec((1, N), lambda i: (0, 0)),
                pl.BlockSpec((tm, N), lambda i: (i, 0)),   # residual
                pl.BlockSpec((1, N), lambda i: (0, 0)),    # LN gamma
                pl.BlockSpec((1, N), lambda i: (0, 0)),    # LN beta
            ],
            out_specs=pl.BlockSpec((tm, N), lambda i: (i, 0)),
            compiler_params=_cparams(1),
        )(*args)
    return pl.pallas_call(
        functools.partial(_linear_addln_acc_kernel, eps=eps),
        out_shape=jax.ShapeDtypeStruct((M, N), out_dtype),
        grid=(M // tm, K // tk),
        in_specs=[
            pl.BlockSpec((tm, tk), lambda i, k: (i, k)),
            pl.BlockSpec((tk, N), lambda i, k: (k, 0)),
            pl.BlockSpec((1, N), lambda i, k: (0, 0)),
            pl.BlockSpec((tm, N), lambda i, k: (i, 0)),    # residual
            pl.BlockSpec((1, N), lambda i, k: (0, 0)),     # LN gamma
            pl.BlockSpec((1, N), lambda i, k: (0, 0)),     # LN beta
        ],
        out_specs=pl.BlockSpec((tm, N), lambda i, k: (i, 0)),
        scratch_shapes=[pltpu.VMEM((tm, N), jnp.float32)],
        compiler_params=_cparams(1, 1),
    )(*args)


# ---------------------------------------------------------------------------
# Fused embedding add (tok + pos + type) + LayerNorm  -> bf16 hidden states
# ---------------------------------------------------------------------------
def _emb_ln_kernel(t_ref, p_ref, s_ref, g_ref, b_ref, o_ref, *, eps):
    s = (t_ref[...].astype(jnp.float32) + p_ref[...].astype(jnp.float32)
         + s_ref[...].astype(jnp.float32))
    o_ref[...] = _torch_layernorm(s, g_ref[...], b_ref[...], eps).astype(o_ref.dtype)


def embed_add_layernorm(tok, pos, typ, g, b, eps=EPS,
                        out_dtype=jnp.bfloat16, tm=512):
    M, H = tok.shape
    tm = _tile_sub(M, tm)
    return pl.pallas_call(
        functools.partial(_emb_ln_kernel, eps=eps),
        out_shape=jax.ShapeDtypeStruct((M, H), out_dtype),
        grid=(M // tm,),
        in_specs=[pl.BlockSpec((tm, H), lambda i: (i, 0))] * 3
                 + [pl.BlockSpec((1, H), lambda i: (0, 0))] * 2,
        out_specs=pl.BlockSpec((tm, H), lambda i: (i, 0)),
        compiler_params=_cparams(1),
    )(tok, pos, typ, g.reshape(1, H), b.reshape(1, H))


# ---------------------------------------------------------------------------
# Multi-head attention: grid over (batch, head, query-tile).
# Each program works on a (tq, S) f32 score block for a single head, so the
# live set is bounded regardless of S, every grid axis is parallel (megacore /
# v7x 2-TC friendly) and all blocks arrive lane-contiguous via BlockSpec.
# ---------------------------------------------------------------------------
def _mha_kernel(q_ref, k_ref, v_ref, m_ref, o_ref, *, scale):
    q = q_ref[0, 0].astype(jnp.bfloat16)                       # (tq, Dh)
    k = k_ref[0, 0].astype(jnp.bfloat16)                       # (S,  Dh)
    v = v_ref[0, 0].astype(jnp.bfloat16)                       # (S,  Dh)
    s = jax.lax.dot_general(q, k, (((1,), (1,)), ((), ())),
                            preferred_element_type=jnp.float32) * scale    # (tq, S)
    m = m_ref[0]                                               # (1, S): 0 == masked
    s = jnp.where(m == 0.0, -1e9, s)                           # masked_fill(mask==0, -1e9)
    s = s - jnp.max(s, axis=-1, keepdims=True)
    p = jnp.exp(s)
    p = p * pl.reciprocal(jnp.sum(p, axis=-1, keepdims=True), approx=True)
    o = jnp.dot(p.astype(jnp.bfloat16), v, preferred_element_type=jnp.float32)
    o_ref[0, 0] = o.astype(o_ref.dtype)


def multihead_attention(q, k, v, mask, tq=256, out_dtype=jnp.bfloat16):
    """q/k/v: (B, H, S, Dh); mask: (B, 1, S) with 0 for masked keys."""
    B, H, S, Dh = q.shape
    scale = 1.0 / math.sqrt(Dh)
    tq = _tile_sub(S, tq)
    # TODO(synk): stream K/V over a fourth grid axis (flash-style online softmax)
    # for very long sequences (S >= 4096) to bound the (tq, S) score block further.
    return pl.pallas_call(
        functools.partial(_mha_kernel, scale=scale),
        out_shape=jax.ShapeDtypeStruct((B, H, S, Dh), out_dtype),
        grid=(B, H, S // tq),
        in_specs=[
            pl.BlockSpec((1, 1, tq, Dh), lambda b, h, i: (b, h, i, 0)),
            pl.BlockSpec((1, 1, S, Dh), lambda b, h, i: (b, h, 0, 0)),
            pl.BlockSpec((1, 1, S, Dh), lambda b, h, i: (b, h, 0, 0)),
            pl.BlockSpec((1, 1, S), lambda b, h, i: (b, 0, 0)),
        ],
        out_specs=pl.BlockSpec((1, 1, tq, Dh), lambda b, h, i: (b, h, i, 0)),
        compiler_params=_cparams(3),
    )(q, k, v, mask)


# ---------------------------------------------------------------------------
# Parameters (synthetic, deterministic); weight matrices stored in bf16
# ---------------------------------------------------------------------------
def init_params(key, cfg):
    E = cfg["hidden_size"]
    F = cfg["intermediate_size"]
    keys = jax.random.split(key, 8 + cfg["num_hidden_layers"])

    def mat(k, shape):
        return (jax.random.normal(k, shape, jnp.float32) * 0.02).astype(jnp.bfloat16)

    params = {
        "tok_emb": jax.random.normal(keys[0], (cfg["vocab_size"], E), jnp.float32) * 0.02,
        "pos_emb": jax.random.normal(keys[1], (cfg["max_position_embeddings"], E), jnp.float32) * 0.02,
        "type_emb": jax.random.normal(keys[2], (cfg["type_vocab_size"], E), jnp.float32) * 0.02,
        "emb_ln_g": jnp.ones((E,), jnp.float32),
        "emb_ln_b": jnp.zeros((E,), jnp.float32),
        "pool_w": mat(keys[3], (E, E)),
        "pool_b": jnp.zeros((E,), jnp.float32),
        "layers": [],
    }
    for li in range(cfg["num_hidden_layers"]):
        k = jax.random.split(keys[8 + li], 6)
        wq, wk, wv = mat(k[0], (E, E)), mat(k[1], (E, E)), mat(k[2], (E, E))
        params["layers"].append({
            "wqkv": jnp.concatenate([wq, wk, wv], axis=1),          # fused (E, 3E)
            "bqkv": jnp.zeros((3 * E,), jnp.float32),
            "wo": mat(k[3], (E, E)), "bo": jnp.zeros((E,), jnp.float32),
            "ln1_g": jnp.ones((E,), jnp.float32), "ln1_b": jnp.zeros((E,), jnp.float32),
            "w_ff": mat(k[4], (E, F)), "b_ff": jnp.zeros((F,), jnp.float32),
            "w_out": mat(k[5], (F, E)), "b_out": jnp.zeros((E,), jnp.float32),
            "ln2_g": jnp.ones((E,), jnp.float32), "ln2_b": jnp.zeros((E,), jnp.float32),
        })
    return params


# ---------------------------------------------------------------------------
# BertModel forward
# ---------------------------------------------------------------------------
def bert_forward(params, cfg, token_idxs, position_idxs, token_type_idxs, masks):
    B, S = token_idxs.shape
    E = cfg["hidden_size"]
    H = cfg["num_attention_heads"]
    Dh = E // H

    # Embedding gathers are glue (plain JAX indexing); the three adds + LayerNorm
    # are fused in one Pallas kernel (no f32 HBM round-trip of the summed tensor).
    tok = params["tok_emb"][token_idxs].reshape(B * S, E)
    pos = params["pos_emb"][position_idxs].reshape(B * S, E)
    typ = params["type_emb"][token_type_idxs].reshape(B * S, E)
    x2 = embed_add_layernorm(tok, pos, typ, params["emb_ln_g"], params["emb_ln_b"])
    # TODO(synk): dropout layers are treated as identity (eval / inference mode).

    mask3 = masks.astype(jnp.float32).reshape(B, 1, S)

    # Stack layer params so the encoder loop is a single scanned body.
    stacked = jax.tree_util.tree_map(lambda *xs: jnp.stack(xs, axis=0),
                                     *params["layers"])

    def layer_fn(h2, p):
        # --- multihead self-attention: fused QKV projection (bf16) ---
        qkv = linear_act(h2, p["wqkv"], p["bqkv"])                   # (B*S, 3E) bf16
        qkv = qkv.reshape(B, S, 3, H, Dh).transpose(2, 0, 3, 1, 4)   # (3, B, H, S, Dh)
        attn = multihead_attention(qkv[0], qkv[1], qkv[2], mask3)    # (B, H, S, Dh)
        attn = attn.transpose(0, 2, 1, 3).reshape(B * S, E)          # (B*S, E) bf16
        # output projection fused with residual add + LayerNorm
        h2n = linear_add_ln(attn, p["wo"], p["bo"], h2, p["ln1_g"], p["ln1_b"])
        # --- feed-forward (gelu fused; output projection fused with add+LN) ---
        ff = linear_act(h2n, p["w_ff"], p["b_ff"], act="gelu")       # (B*S, F) bf16
        h2n = linear_add_ln(ff, p["w_out"], p["b_out"], h2n, p["ln2_g"], p["ln2_b"])
        return h2n, None

    x2, _ = jax.lax.scan(layer_fn, x2, stacked)

    sequence_output = x2.astype(jnp.float32).reshape(B, S, E)        # (B, S, E)
    first_token = sequence_output[:, 0, :]                           # (B, E)
    # Pooler: tiny (B, E) x (E, E) GEMM -- grid overhead dominates, use XLA.
    pooled = jnp.tanh(jnp.dot(first_token, params["pool_w"].astype(jnp.float32))
                      + params["pool_b"])
    return sequence_output, pooled


# ---------------------------------------------------------------------------
if __name__ == "__main__":
    cfg = dict(hidden_size=32, num_hidden_layers=2, num_attention_heads=4,
               intermediate_size=64, vocab_size=50, type_vocab_size=2,
               max_position_embeddings=16, hidden_dropout_prob=0.1)
    B, S = 2, 8

    key = jax.random.PRNGKey(0)
    kp, kt = jax.random.split(key, 2)
    params = init_params(kp, cfg)

    token_idxs = jax.random.randint(kt, (B, S), 0, cfg["vocab_size"], dtype=jnp.int32)
    position_idxs = jnp.broadcast_to(jnp.arange(S, dtype=jnp.int32), (B, S))
    token_type_idxs = jnp.concatenate(
        [jnp.zeros((B, S // 2), jnp.int32), jnp.ones((B, S - S // 2), jnp.int32)], axis=1)
    masks = jnp.ones((B, S), jnp.float32).at[:, -2:].set(0.0)  # last 2 tokens padded

    fwd = jax.jit(lambda prm, t, p, tt, m: bert_forward(prm, cfg, t, p, tt, m))
    seq_out, pooled = fwd(params, token_idxs, position_idxs, token_type_idxs, masks)
    jax.block_until_ready((seq_out, pooled))

    assert seq_out.shape == (B, S, cfg["hidden_size"])
    assert pooled.shape == (B, cfg["hidden_size"])
    assert bool(jnp.all(jnp.isfinite(seq_out))) and bool(jnp.all(jnp.isfinite(pooled)))
    print("KERNEL_OK")
</pallas_src>

<mosaic_0001>
module attributes {stable_mosaic.version = 11 : i64} {
  func.func @_emb_ln_kernel(%arg0: i32, %arg1: memref<16x32xf32, #tpu.memory_space<vmem>>, %arg2: memref<16x32xf32, #tpu.memory_space<vmem>>, %arg3: memref<16x32xf32, #tpu.memory_space<vmem>>, %arg4: memref<1x32xf32, #tpu.memory_space<vmem>>, %arg5: memref<1x32xf32, #tpu.memory_space<vmem>>, %arg6: memref<16x32xbf16, #tpu.memory_space<vmem>>) attributes {dimension_semantics = [#tpu.dimension_semantics<parallel>], iteration_bounds = array<i64: 1>, scalar_prefetch = 0 : i64, scratch_operands = 0 : i64, tpu.core_type = #tpu.core_type<tc>, window_params = [{transform_indices = @transform_0, window_bounds = array<i64: 16, 32>}, {transform_indices = @transform_1, window_bounds = array<i64: 16, 32>}, {transform_indices = @transform_2, window_bounds = array<i64: 16, 32>}, {pipeline_mode = #tpu.pipeline_mode<synchronous>, transform_indices = @transform_3, window_bounds = array<i64: 1, 32>}, {pipeline_mode = #tpu.pipeline_mode<synchronous>, transform_indices = @transform_4, window_bounds = array<i64: 1, 32>}, {transform_indices = @transform_5, window_bounds = array<i64: 16, 32>}]} {
    %c0 = arith.constant 0 : index
    %c0_0 = arith.constant 0 : index
    %0 = vector.load %arg1[%c0, %c0_0] : memref<16x32xf32, #tpu.memory_space<vmem>>, vector<16x32xf32>
    %c0_1 = arith.constant 0 : index
    %c0_2 = arith.constant 0 : index
    %1 = vector.load %arg2[%c0_1, %c0_2] : memref<16x32xf32, #tpu.memory_space<vmem>>, vector<16x32xf32>
    %2 = arith.addf %0, %1 : vector<16x32xf32>
    %c0_3 = arith.constant 0 : index
    %c0_4 = arith.constant 0 : index
    %3 = vector.load %arg3[%c0_3, %c0_4] : memref<16x32xf32, #tpu.memory_space<vmem>>, vector<16x32xf32>
    %4 = arith.addf %2, %3 : vector<16x32xf32>
    %c0_5 = arith.constant 0 : index
    %c0_6 = arith.constant 0 : index
    %5 = vector.load %arg4[%c0_5, %c0_6] : memref<1x32xf32, #tpu.memory_space<vmem>>, vector<1x32xf32>
    %c0_7 = arith.constant 0 : index
    %c0_8 = arith.constant 0 : index
    %6 = vector.load %arg5[%c0_7, %c0_8] : memref<1x32xf32, #tpu.memory_space<vmem>>, vector<1x32xf32>
    %cst = arith.constant dense<0.000000e+00> : vector<16xf32>
    %7 = vector.multi_reduction <add>, %4, %cst [1] : vector<16x32xf32> to vector<16xf32>
    %8 = vector.shape_cast %7 : vector<16xf32> to vector<16x1xf32>
    %cst_9 = arith.constant 3.200000e+01 : f32
    %9 = vector.broadcast %cst_9 : f32 to vector<16x1xf32>
    %10 = arith.divf %8, %9 : vector<16x1xf32>
    %11 = vector.broadcast %10 : vector<16x1xf32> to vector<16x32xf32>
    %12 = arith.subf %4, %11 : vector<16x32xf32>
    %13 = arith.mulf %12, %12 : vector<16x32xf32>
    %cst_10 = arith.constant dense<0.000000e+00> : vector<16xf32>
    %14 = vector.multi_reduction <add>, %13, %cst_10 [1] : vector<16x32xf32> to vector<16xf32>
    %15 = vector.shape_cast %14 : vector<16xf32> to vector<16x1xf32>
    %cst_11 = arith.constant 3.100000e+01 : f32
    %16 = vector.broadcast %cst_11 : f32 to vector<16x1xf32>
    %17 = arith.divf %15, %16 : vector<16x1xf32>
    %18 = vector.broadcast %5 : vector<1x32xf32> to vector<16x32xf32>
    %19 = arith.mulf %18, %12 : vector<16x32xf32>
    %20 = math.sqrt %17 : vector<16x1xf32>
    %cst_12 = arith.constant 9.99999997E-7 : f32
    %21 = vector.broadcast %cst_12 : f32 to vector<16x1xf32>
    %22 = arith.addf %20, %21 : vector<16x1xf32>
    %23 = vector.broadcast %22 : vector<16x1xf32> to vector<16x32xf32>
    %24 = arith.divf %19, %23 : vector<16x32xf32>
    %25 = vector.broadcast %6 : vector<1x32xf32> to vector<16x32xf32>
    %26 = arith.addf %24, %25 : vector<16x32xf32>
    %27 = arith.truncf %26 : vector<16x32xf32> to vector<16x32xbf16>
    %c0_13 = arith.constant 0 : index
    %c0_14 = arith.constant 0 : index
    %28 = vector.load %arg6[%c0_13, %c0_14] : memref<16x32xbf16, #tpu.memory_space<vmem>>, vector<16x32xbf16>
    tpu.vector_store %arg6[%c0_13, %c0_14], %27 {strides = array<i32>} : memref<16x32xbf16, #tpu.memory_space<vmem>>, vector<16x32xbf16>,
    return
  }
  func.func @transform_0(%arg0: i32) -> (i32, i32) {
    %c0_i32 = arith.constant 0 : i32
    %c0_i32_0 = arith.constant 0 : i32
    return %arg0, %c0_i32 : i32, i32
  }
  func.func @transform_1(%arg0: i32) -> (i32, i32) {
    %c0_i32 = arith.constant 0 : i32
    %c0_i32_0 = arith.constant 0 : i32
    return %arg0, %c0_i32 : i32, i32
  }
  func.func @transform_2(%arg0: i32) -> (i32, i32) {
    %c0_i32 = arith.constant 0 : i32
    %c0_i32_0 = arith.constant 0 : i32
    return %arg0, %c0_i32 : i32, i32
  }
  func.func @transform_3(%arg0: i32) -> (i32, i32) {
    %c0_i32 = arith.constant 0 : i32
    %c0_i32_0 = arith.constant 0 : i32
    %c0_i32_1 = arith.constant 0 : i32
    return %c0_i32, %c0_i32_0 : i32, i32
  }
  func.func @transform_4(%arg0: i32) -> (i32, i32) {
    %c0_i32 = arith.constant 0 : i32
    %c0_i32_0 = arith.constant 0 : i32
    %c0_i32_1 = arith.constant 0 : i32
    return %c0_i32, %c0_i32_0 : i32, i32
  }
  func.func @transform_5(%arg0: i32) -> (i32, i32) {
    %c0_i32 = arith.constant 0 : i32
    %c0_i32_0 = arith.constant 0 : i32
    return %arg0, %c0_i32 : i32, i32
  }
}

module attributes {stable_mosaic.version = 11 : i64} {
  func.func @_linear_kernel(%arg0: i32, %arg1: i32, %arg2: memref<16x32xbf16, #tpu.memory_space<vmem>>, %arg3: memref<32x96xbf16, #tpu.memory_space<vmem>>, %arg4: memref<1x96xf32, #tpu.memory_space<vmem>>, %arg5: memref<16x96xbf16, #tpu.memory_space<vmem>>) attributes {dimension_semantics = [#tpu.dimension_semantics<parallel>, #tpu.dimension_semantics<parallel>], iteration_bounds = array<i64: 1, 1>, scalar_prefetch = 0 : i64, scratch_operands = 0 : i64, tpu.core_type = #tpu.core_type<tc>, window_params = [{transform_indices = @transform_0, window_bounds = array<i64: 16, 32>}, {transform_indices = @transform_1, window_bounds = array<i64: 32, 96>}, {transform_indices = @transform_2, window_bounds = array<i64: 1, 96>}, {transform_indices = @transform_3, window_bounds = array<i64: 16, 96>}]} {
    %c0 = arith.constant 0 : index
    %c0_0 = arith.constant 0 : index
    %0 = vector.load %arg2[%c0, %c0_0] : memref<16x32xbf16, #tpu.memory_space<vmem>>, vector<16x32xbf16>
    %c0_1 = arith.constant 0 : index
    %c0_2 = arith.constant 0 : index
    %1 = vector.load %arg3[%c0_1, %c0_2] : memref<32x96xbf16, #tpu.memory_space<vmem>>, vector<32x96xbf16>
    %cst = arith.constant dense<0.000000e+00> : vector<16x96xf32>
    %2 = tpu.matmul %0, %1, %cst {dimension_numbers = #tpu.dot_dimension_numbers<[1], [0], [0], [1], [0, 0, 1, 1], [], []>} : vector<16x32xbf16>, vector<32x96xbf16>, vector<16x96xf32> -> vector<16x96xf32>
    %c0_3 = arith.constant 0 : index
    %c0_4 = arith.constant 0 : index
    %3 = vector.load %arg4[%c0_3, %c0_4] : memref<1x96xf32, #tpu.memory_space<vmem>>, vector<1x96xf32>
    %4 = vector.broadcast %3 : vector<1x96xf32> to vector<16x96xf32>
    %5 = arith.addf %2, %4 : vector<16x96xf32>
    %6 = arith.truncf %5 : vector<16x96xf32> to vector<16x96xbf16>
    %c0_5 = arith.constant 0 : index
    %c0_6 = arith.constant 0 : index
    %7 = vector.load %arg5[%c0_5, %c0_6] : memref<16x96xbf16, #tpu.memory_space<vmem>>, vector<16x96xbf16>
    tpu.vector_store %arg5[%c0_5, %c0_6], %6 {strides = array<i32>} : memref<16x96xbf16, #tpu.memory_space<vmem>>, vector<16x96xbf16>,
    return
  }
  func.func @transform_0(%arg0: i32, %arg1: i32) -> (i32, i32) {
    %c0_i32 = arith.constant 0 : i32
    %c0_i32_0 = arith.constant 0 : i32
    return %arg0, %c0_i32 : i32, i32
  }
  func.func @transform_1(%arg0: i32, %arg1: i32) -> (i32, i32) {
    %c0_i32 = arith.constant 0 : i32
    %c0_i32_0 = arith.constant 0 : i32
    return %c0_i32, %arg1 : i32, i32
  }
  func.func @transform_2(%arg0: i32, %arg1: i32) -> (i32, i32) {
    %c0_i32 = arith.constant 0 : i32
    %c0_i32_0 = arith.constant 0 : i32
    return %c0_i32, %arg1 : i32, i32
  }
  func.func @transform_3(%arg0: i32, %arg1: i32) -> (i32, i32) {
    %c0_i32 = arith.constant 0 : i32
    return %arg0, %arg1 : i32, i32
  }
}

module attributes {stable_mosaic.version = 11 : i64} {
  func.func @_mha_kernel(%arg0: i32, %arg1: i32, %arg2: i32, %arg3: memref<1x1x8x8xbf16, #tpu.memory_space<vmem>>, %arg4: memref<1x1x8x8xbf16, #tpu.memory_space<vmem>>, %arg5: memref<1x1x8x8xbf16, #tpu.memory_space<vmem>>, %arg6: memref<1x1x8xf32, #tpu.memory_space<vmem>>, %arg7: memref<1x1x8x8xbf16, #tpu.memory_space<vmem>>) attributes {dimension_semantics = [#tpu.dimension_semantics<parallel>, #tpu.dimension_semantics<parallel>, #tpu.dimension_semantics<parallel>], iteration_bounds = array<i64: 2, 4, 1>, scalar_prefetch = 0 : i64, scratch_operands = 0 : i64, tpu.core_type = #tpu.core_type<tc>, window_params = [{transform_indices = @transform_0, window_bounds = array<i64: 1, 1, 8, 8>}, {transform_indices = @transform_1, window_bounds = array<i64: 1, 1, 8, 8>}, {transform_indices = @transform_2, window_bounds = array<i64: 1, 1, 8, 8>}, {transform_indices = @transform_3, window_bounds = array<i64: 1, 1, 8>}, {transform_indices = @transform_4, window_bounds = array<i64: 1, 1, 8, 8>}]} {
    %c0 = arith.constant 0 : index
    %c0_0 = arith.constant 0 : index
    %c0_1 = arith.constant 0 : index
    %c0_2 = arith.constant 0 : index
    %0 = vector.load %arg3[%c0, %c0_0, %c0_1, %c0_2] : memref<1x1x8x8xbf16, #tpu.memory_space<vmem>>, vector<1x1x8x8xbf16>
    %1 = vector.shape_cast %0 : vector<1x1x8x8xbf16> to vector<8x8xbf16>
    %c0_3 = arith.constant 0 : index
    %c0_4 = arith.constant 0 : index
    %c0_5 = arith.constant 0 : index
    %c0_6 = arith.constant 0 : index
    %2 = vector.load %arg4[%c0_3, %c0_4, %c0_5, %c0_6] : memref<1x1x8x8xbf16, #tpu.memory_space<vmem>>, vector<1x1x8x8xbf16>
    %3 = vector.shape_cast %2 : vector<1x1x8x8xbf16> to vector<8x8xbf16>
    %c0_7 = arith.constant 0 : index
    %c0_8 = arith.constant 0 : index
    %c0_9 = arith.constant 0 : index
    %c0_10 = arith.constant 0 : index
    %4 = vector.load %arg5[%c0_7, %c0_8, %c0_9, %c0_10] : memref<1x1x8x8xbf16, #tpu.memory_space<vmem>>, vector<1x1x8x8xbf16>
    %5 = vector.shape_cast %4 : vector<1x1x8x8xbf16> to vector<8x8xbf16>
    %cst = arith.constant dense<0.000000e+00> : vector<8x8xf32>
    %6 = tpu.matmul %1, %3, %cst {dimension_numbers = #tpu.dot_dimension_numbers<[1], [1], [0], [0], [0, 0, 1, 0], [], []>} : vector<8x8xbf16>, vector<8x8xbf16>, vector<8x8xf32> -> vector<8x8xf32>
    %cst_11 = arith.constant 0.353553385 : f32
    %7 = vector.broadcast %cst_11 : f32 to vector<8x8xf32>
    %8 = arith.mulf %6, %7 : vector<8x8xf32>
    %c0_12 = arith.constant 0 : index
    %c0_13 = arith.constant 0 : index
    %c0_14 = arith.constant 0 : index
    %9 = vector.load %arg6[%c0_12, %c0_13, %c0_14] : memref<1x1x8xf32, #tpu.memory_space<vmem>>, vector<1x1x8xf32>
    %10 = vector.shape_cast %9 : vector<1x1x8xf32> to vector<1x8xf32>
    %cst_15 = arith.constant 0.000000e+00 : f32
    %11 = vector.broadcast %cst_15 : f32 to vector<1x8xf32>
    %12 = arith.cmpf oeq, %10, %11 : vector<1x8xf32>
    %cst_16 = arith.constant -1.000000e+09 : f32
    %13 = vector.shape_cast %12 : vector<1x8xi1> to vector<1x8xi1>
    %14 = vector.broadcast %13 : vector<1x8xi1> to vector<8x8xi1>
    %15 = vector.broadcast %cst_16 : f32 to vector<8x8xf32>
    %16 = arith.select %14, %15, %8 : vector<8x8xi1>, vector<8x8xf32>
    %cst_17 = arith.constant dense<0xFF800000> : vector<8xf32>
    %17 = vector.multi_reduction <maximumf>, %16, %cst_17 [1] : vector<8x8xf32> to vector<8xf32>
    %18 = vector.shape_cast %17 : vector<8xf32> to vector<8x1xf32>
    %19 = vector.broadcast %18 : vector<8x1xf32> to vector<8x8xf32>
    %20 = arith.subf %16, %19 : vector<8x8xf32>
    %21 = math.exp %20 : vector<8x8xf32>
    %cst_18 = arith.constant dense<0.000000e+00> : vector<8xf32>
    %22 = vector.multi_reduction <add>, %21, %cst_18 [1] : vector<8x8xf32> to vector<8xf32>
    %23 = vector.shape_cast %22 : vector<8xf32> to vector<8x1xf32>
    %24 = tpu.reciprocal %23 {approx = true} : vector<8x1xf32> -> vector<8x1xf32>
    %25 = vector.broadcast %24 : vector<8x1xf32> to vector<8x8xf32>
    %26 = arith.mulf %21, %25 : vector<8x8xf32>
    %27 = arith.truncf %26 : vector<8x8xf32> to vector<8x8xbf16>
    %cst_19 = arith.constant dense<0.000000e+00> : vector<8x8xf32>
    %28 = tpu.matmul %27, %5, %cst_19 {dimension_numbers = #tpu.dot_dimension_numbers<[1], [0], [0], [1], [0, 0, 1, 1], [], []>} : vector<8x8xbf16>, vector<8x8xbf16>, vector<8x8xf32> -> vector<8x8xf32>
    %29 = arith.truncf %28 : vector<8x8xf32> to vector<8x8xbf16>
    %c0_20 = arith.constant 0 : index
    %c0_21 = arith.constant 0 : index
    %c0_22 = arith.constant 0 : index
    %c0_23 = arith.constant 0 : index
    %30 = vector.load %arg7[%c0_20, %c0_21, %c0_22, %c0_23] : memref<1x1x8x8xbf16, #tpu.memory_space<vmem>>, vector<1x1x8x8xbf16>
    %31 = vector.shape_cast %30 : vector<1x1x8x8xbf16> to vector<8x8xbf16>
    %32 = vector.shape_cast %29 : vector<8x8xbf16> to vector<1x1x8x8xbf16>
    tpu.vector_store %arg7[%c0_20, %c0_21, %c0_22, %c0_23], %32 {strides = array<i32>} : memref<1x1x8x8xbf16, #tpu.memory_space<vmem>>, vector<1x1x8x8xbf16>,
    return
  }
  func.func @transform_0(%arg0: i32, %arg1: i32, %arg2: i32) -> (i32, i32, i32, i32) {
    %c0_i32 = arith.constant 0 : i32
    %c0_i32_0 = arith.constant 0 : i32
    return %arg0, %arg1, %arg2, %c0_i32 : i32, i32, i32, i32
  }
  func.func @transform_1(%arg0: i32, %arg1: i32, %arg2: i32) -> (i32, i32, i32, i32) {
    %c0_i32 = arith.constant 0 : i32
    %c0_i32_0 = arith.constant 0 : i32
    %c0_i32_1 = arith.constant 0 : i32
    return %arg0, %arg1, %c0_i32, %c0_i32_0 : i32, i32, i32, i32
  }
  func.func @transform_2(%arg0: i32, %arg1: i32, %arg2: i32) -> (i32, i32, i32, i32) {
    %c0_i32 = arith.constant 0 : i32
    %c0_i32_0 = arith.constant 0 : i32
    %c0_i32_1 = arith.constant 0 : i32
    return %arg0, %arg1, %c0_i32, %c0_i32_0 : i32, i32, i32, i32
  }
  func.func @transform_3(%arg0: i32, %arg1: i32, %arg2: i32) -> (i32, i32, i32) {
    %c0_i32 = arith.constant 0 : i32
    %c0_i32_0 = arith.constant 0 : i32
    %c0_i32_1 = arith.constant 0 : i32
    return %arg0, %c0_i32, %c0_i32_0 : i32, i32, i32
  }
  func.func @transform_4(%arg0: i32, %arg1: i32, %arg2: i32) -> (i32, i32, i32, i32) {
    %c0_i32 = arith.constant 0 : i32
    %c0_i32_0 = arith.constant 0 : i32
    return %arg0, %arg1, %arg2, %c0_i32 : i32, i32, i32, i32
  }
}

module attributes {stable_mosaic.version = 11 : i64} {
  func.func @_linear_addln_kernel(%arg0: i32, %arg1: memref<16x32xbf16, #tpu.memory_space<vmem>>, %arg2: memref<32x32xbf16, #tpu.memory_space<vmem>>, %arg3: memref<1x32xf32, #tpu.memory_space<vmem>>, %arg4: memref<16x32xbf16, #tpu.memory_space<vmem>>, %arg5: memref<1x32xf32, #tpu.memory_space<vmem>>, %arg6: memref<1x32xf32, #tpu.memory_space<vmem>>, %arg7: memref<16x32xbf16, #tpu.memory_space<vmem>>) attributes {dimension_semantics = [#tpu.dimension_semantics<parallel>], iteration_bounds = array<i64: 1>, scalar_prefetch = 0 : i64, scratch_operands = 0 : i64, tpu.core_type = #tpu.core_type<tc>, window_params = [{transform_indices = @transform_0, window_bounds = array<i64: 16, 32>}, {pipeline_mode = #tpu.pipeline_mode<synchronous>, transform_indices = @transform_1, window_bounds = array<i64: 32, 32>}, {pipeline_mode = #tpu.pipeline_mode<synchronous>, transform_indices = @transform_2, window_bounds = array<i64: 1, 32>}, {transform_indices = @transform_3, window_bounds = array<i64: 16, 32>}, {pipeline_mode = #tpu.pipeline_mode<synchronous>, transform_indices = @transform_4, window_bounds = array<i64: 1, 32>}, {pipeline_mode = #tpu.pipeline_mode<synchronous>, transform_indices = @transform_5, window_bounds = array<i64: 1, 32>}, {transform_indices = @transform_6, window_bounds = array<i64: 16, 32>}]} {
    %c0 = arith.constant 0 : index
    %c0_0 = arith.constant 0 : index
    %0 = vector.load %arg1[%c0, %c0_0] : memref<16x32xbf16, #tpu.memory_space<vmem>>, vector<16x32xbf16>
    %c0_1 = arith.constant 0 : index
    %c0_2 = arith.constant 0 : index
    %1 = vector.load %arg2[%c0_1, %c0_2] : memref<32x32xbf16, #tpu.memory_space<vmem>>, vector<32x32xbf16>
    %cst = arith.constant dense<0.000000e+00> : vector<16x32xf32>
    %2 = tpu.matmul %0, %1, %cst {dimension_numbers = #tpu.dot_dimension_numbers<[1], [0], [0], [1], [0, 0, 1, 1], [], []>} : vector<16x32xbf16>, vector<32x32xbf16>, vector<16x32xf32> -> vector<16x32xf32>
    %c0_3 = arith.constant 0 : index
    %c0_4 = arith.constant 0 : index
    %3 = vector.load %arg4[%c0_3, %c0_4] : memref<16x32xbf16, #tpu.memory_space<vmem>>, vector<16x32xbf16>
    %4 = arith.extf %3 : vector<16x32xbf16> to vector<16x32xf32>
    %5 = arith.addf %4, %2 : vector<16x32xf32>
    %c0_5 = arith.constant 0 : index
    %c0_6 = arith.constant 0 : index
    %6 = vector.load %arg3[%c0_5, %c0_6] : memref<1x32xf32, #tpu.memory_space<vmem>>, vector<1x32xf32>
    %7 = vector.broadcast %6 : vector<1x32xf32> to vector<16x32xf32>
    %8 = arith.addf %5, %7 : vector<16x32xf32>
    %c0_7 = arith.constant 0 : index
    %c0_8 = arith.constant 0 : index
    %9 = vector.load %arg5[%c0_7, %c0_8] : memref<1x32xf32, #tpu.memory_space<vmem>>, vector<1x32xf32>
    %c0_9 = arith.constant 0 : index
    %c0_10 = arith.constant 0 : index
    %10 = vector.load %arg6[%c0_9, %c0_10] : memref<1x32xf32, #tpu.memory_space<vmem>>, vector<1x32xf32>
    %cst_11 = arith.constant dense<0.000000e+00> : vector<16xf32>
    %11 = vector.multi_reduction <add>, %8, %cst_11 [1] : vector<16x32xf32> to vector<16xf32>
    %12 = vector.shape_cast %11 : vector<16xf32> to vector<16x1xf32>
    %cst_12 = arith.constant 3.200000e+01 : f32
    %13 = vector.broadcast %cst_12 : f32 to vector<16x1xf32>
    %14 = arith.divf %12, %13 : vector<16x1xf32>
    %15 = vector.broadcast %14 : vector<16x1xf32> to vector<16x32xf32>
    %16 = arith.subf %8, %15 : vector<16x32xf32>
    %17 = arith.mulf %16, %16 : vector<16x32xf32>
    %cst_13 = arith.constant dense<0.000000e+00> : vector<16xf32>
    %18 = vector.multi_reduction <add>, %17, %cst_13 [1] : vector<16x32xf32> to vector<16xf32>
    %19 = vector.shape_cast %18 : vector<16xf32> to vector<16x1xf32>
    %cst_14 = arith.constant 3.100000e+01 : f32
    %20 = vector.broadcast %cst_14 : f32 to vector<16x1xf32>
    %21 = arith.divf %19, %20 : vector<16x1xf32>
    %22 = vector.broadcast %9 : vector<1x32xf32> to vector<16x32xf32>
    %23 = arith.mulf %22, %16 : vector<16x32xf32>
    %24 = math.sqrt %21 : vector<16x1xf32>
    %cst_15 = arith.constant 9.99999997E-7 : f32
    %25 = vector.broadcast %cst_15 : f32 to vector<16x1xf32>
    %26 = arith.addf %24, %25 : vector<16x1xf32>
    %27 = vector.broadcast %26 : vector<16x1xf32> to vector<16x32xf32>
    %28 = arith.divf %23, %27 : vector<16x32xf32>
    %29 = vector.broadcast %10 : vector<1x32xf32> to vector<16x32xf32>
    %30 = arith.addf %28, %29 : vector<16x32xf32>
    %31 = arith.truncf %30 : vector<16x32xf32> to vector<16x32xbf16>
    %c0_16 = arith.constant 0 : index
    %c0_17 = arith.constant 0 : index
    %32 = vector.load %arg7[%c0_16, %c0_17] : memref<16x32xbf16, #tpu.memory_space<vmem>>, vector<16x32xbf16>
    tpu.vector_store %arg7[%c0_16, %c0_17], %31 {strides = array<i32>} : memref<16x32xbf16, #tpu.memory_space<vmem>>, vector<16x32xbf16>,
    return
  }
  func.func @transform_0(%arg0: i32) -> (i32, i32) {
    %c0_i32 = arith.constant 0 : i32
    %c0_i32_0 = arith.constant 0 : i32
    return %arg0, %c0_i32 : i32, i32
  }
  func.func @transform_1(%arg0: i32) -> (i32, i32) {
    %c0_i32 = arith.constant 0 : i32
    %c0_i32_0 = arith.constant 0 : i32
    %c0_i32_1 = arith.constant 0 : i32
    return %c0_i32, %c0_i32_0 : i32, i32
  }
  func.func @transform_2(%arg0: i32) -> (i32, i32) {
    %c0_i32 = arith.constant 0 : i32
    %c0_i32_0 = arith.constant 0 : i32
    %c0_i32_1 = arith.constant 0 : i32
    return %c0_i32, %c0_i32_0 : i32, i32
  }
  func.func @transform_3(%arg0: i32) -> (i32, i32) {
    %c0_i32 = arith.constant 0 : i32
    %c0_i32_0 = arith.constant 0 : i32
    return %arg0, %c0_i32 : i32, i32
  }
  func.func @transform_4(%arg0: i32) -> (i32, i32) {
    %c0_i32 = arith.constant 0 : i32
    %c0_i32_0 = arith.constant 0 : i32
    %c0_i32_1 = arith.constant 0 : i32
    return %c0_i32, %c0_i32_0 : i32, i32
  }
  func.func @transform_5(%arg0: i32) -> (i32, i32) {
    %c0_i32 = arith.constant 0 : i32
    %c0_i32_0 = arith.constant 0 : i32
    %c0_i32_1 = arith.constant 0 : i32
    return %c0_i32, %c0_i32_0 : i32, i32
  }
  func.func @transform_6(%arg0: i32) -> (i32, i32) {
    %c0_i32 = arith.constant 0 : i32
    %c0_i32_0 = arith.constant 0 : i32
    return %arg0, %c0_i32 : i32, i32
  }
}

module attributes {stable_mosaic.version = 11 : i64} {
  func.func @_linear_kernel(%arg0: i32, %arg1: i32, %arg2: memref<16x32xbf16, #tpu.memory_space<vmem>>, %arg3: memref<32x64xbf16, #tpu.memory_space<vmem>>, %arg4: memref<1x64xf32, #tpu.memory_space<vmem>>, %arg5: memref<16x64xbf16, #tpu.memory_space<vmem>>) attributes {dimension_semantics = [#tpu.dimension_semantics<parallel>, #tpu.dimension_semantics<parallel>], iteration_bounds = array<i64: 1, 1>, scalar_prefetch = 0 : i64, scratch_operands = 0 : i64, tpu.core_type = #tpu.core_type<tc>, window_params = [{transform_indices = @transform_0, window_bounds = array<i64: 16, 32>}, {transform_indices = @transform_1, window_bounds = array<i64: 32, 64>}, {transform_indices = @transform_2, window_bounds = array<i64: 1, 64>}, {transform_indices = @transform_3, window_bounds = array<i64: 16, 64>}]} {
    %c0 = arith.constant 0 : index
    %c0_0 = arith.constant 0 : index
    %0 = vector.load %arg2[%c0, %c0_0] : memref<16x32xbf16, #tpu.memory_space<vmem>>, vector<16x32xbf16>
    %c0_1 = arith.constant 0 : index
    %c0_2 = arith.constant 0 : index
    %1 = vector.load %arg3[%c0_1, %c0_2] : memref<32x64xbf16, #tpu.memory_space<vmem>>, vector<32x64xbf16>
    %cst = arith.constant dense<0.000000e+00> : vector<16x64xf32>
    %2 = tpu.matmul %0, %1, %cst {dimension_numbers = #tpu.dot_dimension_numbers<[1], [0], [0], [1], [0, 0, 1, 1], [], []>} : vector<16x32xbf16>, vector<32x64xbf16>, vector<16x64xf32> -> vector<16x64xf32>
    %c0_3 = arith.constant 0 : index
    %c0_4 = arith.constant 0 : index
    %3 = vector.load %arg4[%c0_3, %c0_4] : memref<1x64xf32, #tpu.memory_space<vmem>>, vector<1x64xf32>
    %4 = vector.broadcast %3 : vector<1x64xf32> to vector<16x64xf32>
    %5 = arith.addf %2, %4 : vector<16x64xf32>
    %6 = arith.mulf %5, %5 : vector<16x64xf32>
    %7 = arith.mulf %5, %6 : vector<16x64xf32>
    %cst_5 = arith.constant 4.471500e-02 : f32
    %8 = vector.broadcast %cst_5 : f32 to vector<16x64xf32>
    %9 = arith.mulf %8, %7 : vector<16x64xf32>
    %10 = arith.addf %5, %9 : vector<16x64xf32>
    %cst_6 = arith.constant 0.797884583 : f32
    %11 = vector.broadcast %cst_6 : f32 to vector<16x64xf32>
    %12 = arith.mulf %11, %10 : vector<16x64xf32>
    %13 = math.tanh %12 : vector<16x64xf32>
    %cst_7 = arith.constant 1.000000e+00 : f32
    %14 = vector.broadcast %cst_7 : f32 to vector<16x64xf32>
    %15 = arith.addf %14, %13 : vector<16x64xf32>
    %cst_8 = arith.constant 5.000000e-01 : f32
    %16 = vector.broadcast %cst_8 : f32 to vector<16x64xf32>
    %17 = arith.mulf %16, %15 : vector<16x64xf32>
    %18 = arith.mulf %5, %17 : vector<16x64xf32>
    %19 = arith.truncf %18 : vector<16x64xf32> to vector<16x64xbf16>
    %c0_9 = arith.constant 0 : index
    %c0_10 = arith.constant 0 : index
    %20 = vector.load %arg5[%c0_9, %c0_10] : memref<16x64xbf16, #tpu.memory_space<vmem>>, vector<16x64xbf16>
    tpu.vector_store %arg5[%c0_9, %c0_10], %19 {strides = array<i32>} : memref<16x64xbf16, #tpu.memory_space<vmem>>, vector<16x64xbf16>,
    return
  }
  func.func @transform_0(%arg0: i32, %arg1: i32) -> (i32, i32) {
    %c0_i32 = arith.constant 0 : i32
    %c0_i32_0 = arith.constant 0 : i32
    return %arg0, %c0_i32 : i32, i32
  }
  func.func @transform_1(%arg0: i32, %arg1: i32) -> (i32, i32) {
    %c0_i32 = arith.constant 0 : i32
    %c0_i32_0 = arith.constant 0 : i32
    return %c0_i32, %arg1 : i32, i32
  }
  func.func @transform_2(%arg0: i32, %arg1: i32) -> (i32, i32) {
    %c0_i32 = arith.constant 0 : i32
    %c0_i32_0 = arith.constant 0 : i32
    return %c0_i32, %arg1 : i32, i32
  }
  func.func @transform_3(%arg0: i32, %arg1: i32) -> (i32, i32) {
    %c0_i32 = arith.constant 0 : i32
    return %arg0, %arg1 : i32, i32
  }
}

module attributes {stable_mosaic.version = 11 : i64} {
  func.func @_linear_addln_kernel(%arg0: i32, %arg1: memref<16x64xbf16, #tpu.memory_space<vmem>>, %arg2: memref<64x32xbf16, #tpu.memory_space<vmem>>, %arg3: memref<1x32xf32, #tpu.memory_space<vmem>>, %arg4: memref<16x32xbf16, #tpu.memory_space<vmem>>, %arg5: memref<1x32xf32, #tpu.memory_space<vmem>>, %arg6: memref<1x32xf32, #tpu.memory_space<vmem>>, %arg7: memref<16x32xbf16, #tpu.memory_space<vmem>>) attributes {dimension_semantics = [#tpu.dimension_semantics<parallel>], iteration_bounds = array<i64: 1>, scalar_prefetch = 0 : i64, scratch_operands = 0 : i64, tpu.core_type = #tpu.core_type<tc>, window_params = [{transform_indices = @transform_0, window_bounds = array<i64: 16, 64>}, {pipeline_mode = #tpu.pipeline_mode<synchronous>, transform_indices = @transform_1, window_bounds = array<i64: 64, 32>}, {pipeline_mode = #tpu.pipeline_mode<synchronous>, transform_indices = @transform_2, window_bounds = array<i64: 1, 32>}, {transform_indices = @transform_3, window_bounds = array<i64: 16, 32>}, {pipeline_mode = #tpu.pipeline_mode<synchronous>, transform_indices = @transform_4, window_bounds = array<i64: 1, 32>}, {pipeline_mode = #tpu.pipeline_mode<synchronous>, transform_indices = @transform_5, window_bounds = array<i64: 1, 32>}, {transform_indices = @transform_6, window_bounds = array<i64: 16, 32>}]} {
    %c0 = arith.constant 0 : index
    %c0_0 = arith.constant 0 : index
    %0 = vector.load %arg1[%c0, %c0_0] : memref<16x64xbf16, #tpu.memory_space<vmem>>, vector<16x64xbf16>
    %c0_1 = arith.constant 0 : index
    %c0_2 = arith.constant 0 : index
    %1 = vector.load %arg2[%c0_1, %c0_2] : memref<64x32xbf16, #tpu.memory_space<vmem>>, vector<64x32xbf16>
    %cst = arith.constant dense<0.000000e+00> : vector<16x32xf32>
    %2 = tpu.matmul %0, %1, %cst {dimension_numbers = #tpu.dot_dimension_numbers<[1], [0], [0], [1], [0, 0, 1, 1], [], []>} : vector<16x64xbf16>, vector<64x32xbf16>, vector<16x32xf32> -> vector<16x32xf32>
    %c0_3 = arith.constant 0 : index
    %c0_4 = arith.constant 0 : index
    %3 = vector.load %arg4[%c0_3, %c0_4] : memref<16x32xbf16, #tpu.memory_space<vmem>>, vector<16x32xbf16>
    %4 = arith.extf %3 : vector<16x32xbf16> to vector<16x32xf32>
    %5 = arith.addf %4, %2 : vector<16x32xf32>
    %c0_5 = arith.constant 0 : index
    %c0_6 = arith.constant 0 : index
    %6 = vector.load %arg3[%c0_5, %c0_6] : memref<1x32xf32, #tpu.memory_space<vmem>>, vector<1x32xf32>
    %7 = vector.broadcast %6 : vector<1x32xf32> to vector<16x32xf32>
    %8 = arith.addf %5, %7 : vector<16x32xf32>
    %c0_7 = arith.constant 0 : index
    %c0_8 = arith.constant 0 : index
    %9 = vector.load %arg5[%c0_7, %c0_8] : memref<1x32xf32, #tpu.memory_space<vmem>>, vector<1x32xf32>
    %c0_9 = arith.constant 0 : index
    %c0_10 = arith.constant 0 : index
    %10 = vector.load %arg6[%c0_9, %c0_10] : memref<1x32xf32, #tpu.memory_space<vmem>>, vector<1x32xf32>
    %cst_11 = arith.constant dense<0.000000e+00> : vector<16xf32>
    %11 = vector.multi_reduction <add>, %8, %cst_11 [1] : vector<16x32xf32> to vector<16xf32>
    %12 = vector.shape_cast %11 : vector<16xf32> to vector<16x1xf32>
    %cst_12 = arith.constant 3.200000e+01 : f32
    %13 = vector.broadcast %cst_12 : f32 to vector<16x1xf32>
    %14 = arith.divf %12, %13 : vector<16x1xf32>
    %15 = vector.broadcast %14 : vector<16x1xf32> to vector<16x32xf32>
    %16 = arith.subf %8, %15 : vector<16x32xf32>
    %17 = arith.mulf %16, %16 : vector<16x32xf32>
    %cst_13 = arith.constant dense<0.000000e+00> : vector<16xf32>
    %18 = vector.multi_reduction <add>, %17, %cst_13 [1] : vector<16x32xf32> to vector<16xf32>
    %19 = vector.shape_cast %18 : vector<16xf32> to vector<16x1xf32>
    %cst_14 = arith.constant 3.100000e+01 : f32
    %20 = vector.broadcast %cst_14 : f32 to vector<16x1xf32>
    %21 = arith.divf %19, %20 : vector<16x1xf32>
    %22 = vector.broadcast %9 : vector<1x32xf32> to vector<16x32xf32>
    %23 = arith.mulf %22, %16 : vector<16x32xf32>
    %24 = math.sqrt %21 : vector<16x1xf32>
    %cst_15 = arith.constant 9.99999997E-7 : f32
    %25 = vector.broadcast %cst_15 : f32 to vector<16x1xf32>
    %26 = arith.addf %24, %25 : vector<16x1xf32>
    %27 = vector.broadcast %26 : vector<16x1xf32> to vector<16x32xf32>
    %28 = arith.divf %23, %27 : vector<16x32xf32>
    %29 = vector.broadcast %10 : vector<1x32xf32> to vector<16x32xf32>
    %30 = arith.addf %28, %29 : vector<16x32xf32>
    %31 = arith.truncf %30 : vector<16x32xf32> to vector<16x32xbf16>
    %c0_16 = arith.constant 0 : index
    %c0_17 = arith.constant 0 : index
    %32 = vector.load %arg7[%c0_16, %c0_17] : memref<16x32xbf16, #tpu.memory_space<vmem>>, vector<16x32xbf16>
    tpu.vector_store %arg7[%c0_16, %c0_17], %31 {strides = array<i32>} : memref<16x32xbf16, #tpu.memory_space<vmem>>, vector<16x32xbf16>,
    return
  }
  func.func @transform_0(%arg0: i32) -> (i32, i32) {
    %c0_i32 = arith.constant 0 : i32
    %c0_i32_0 = arith.constant 0 : i32
    return %arg0, %c0_i32 : i32, i32
  }
  func.func @transform_1(%arg0: i32) -> (i32, i32) {
    %c0_i32 = arith.constant 0 : i32
    %c0_i32_0 = arith.constant 0 : i32
    %c0_i32_1 = arith.constant 0 : i32
    return %c0_i32, %c0_i32_0 : i32, i32
  }
  func.func @transform_2(%arg0: i32) -> (i32, i32) {
    %c0_i32 = arith.constant 0 : i32
    %c0_i32_0 = arith.constant 0 : i32
    %c0_i32_1 = arith.constant 0 : i32
    return %c0_i32, %c0_i32_0 : i32, i32
  }
  func.func @transform_3(%arg0: i32) -> (i32, i32) {
    %c0_i32 = arith.constant 0 : i32
    %c0_i32_0 = arith.constant 0 : i32
    return %arg0, %c0_i32 : i32, i32
  }
  func.func @transform_4(%arg0: i32) -> (i32, i32) {
    %c0_i32 = arith.constant 0 : i32
    %c0_i32_0 = arith.constant 0 : i32
    %c0_i32_1 = arith.constant 0 : i32
    return %c0_i32, %c0_i32_0 : i32, i32
  }
  func.func @transform_5(%arg0: i32) -> (i32, i32) {
    %c0_i32 = arith.constant 0 : i32
    %c0_i32_0 = arith.constant 0 : i32
    %c0_i32_1 = arith.constant 0 : i32
    return %c0_i32, %c0_i32_0 : i32, i32
  }
  func.func @transform_6(%arg0: i32) -> (i32, i32) {
    %c0_i32 = arith.constant 0 : i32
    %c0_i32_0 = arith.constant 0 : i32
    return %arg0, %c0_i32 : i32, i32
  }
}

</mosaic_0001>

<llo_original>
// kernel: _lambda_.1
$region0: #{_lambda_.1}
  #allocation0 [shape = 'u32[]', space=smem, size = 0x4, offset = 0x4, fixed_abs, tag = 'smem constant byte address 0x4 - core index']
  #allocation1 [shape = 'u32[72,128]{1,0:T(1,128)}', space=vmem, size = 0x9000, scoped, tag = 'internal scratch']
  %s0 = inlined_call_operand.vmem [shape: f32[16,32], index: 0, kind: input, shape index: {}]
  %s1 = inlined_call_operand.vmem [shape: f32[16,32], index: 1, kind: input, shape index: {}]
  %s2 = inlined_call_operand.vmem [shape: f32[16,32], index: 2, kind: input, shape index: {}]
  %s3 = inlined_call_operand.vmem [shape: f32[1,32], index: 3, kind: input, shape index: {}]
  %s4 = inlined_call_operand.vmem [shape: f32[1,32], index: 4, kind: input, shape index: {}]
  %s5 = inlined_call_operand.vmem [shape: bf16[16,32], index: 5, kind: output, shape index: {}]
  %s6 = sld [smem:[#allocation0]]
  $region30: #{_lambda_.1} parent=0
    _
  %s8 = ssub.s32 1, %s6
  %s9 = scalar_select 0, %s8, %s6
  // Predicated region
  $region2: #{_lambda_.1} parent=0 // pred_check
    _
  $region3: #{_lambda_.1} parent=0 // pred_check_branch
    %11 = sbr.rel (0) target = $region5
  $region4: #{_lambda_.1} parent=0 // pred_region
    _
  $region5: #{_lambda_.1} parent=0 // pred_fallthru
    _
  // Predicated region
  $region6: #{_lambda_.1} parent=0 // pred_check
    _
  $region7: #{_lambda_.1} parent=0 // pred_check_branch
    %13 = sbr.rel (0) target = $region9
  $region8: #{_lambda_.1} parent=0 // pred_region
    _
  $region9: #{_lambda_.1} parent=0 // pred_fallthru
    _
  // Predicated region
  $region10: #{_lambda_.1} parent=0 // pred_check
    _
  $region11: #{_lambda_.1} parent=0 // pred_check_branch
    %15 = sbr.rel (0) target = $region13
  $region12: #{_lambda_.1} parent=0 // pred_region
    _
  $region13: #{_lambda_.1} parent=0 // pred_fallthru
    _
  // Predicated region
  $region14: #{_lambda_.1} parent=0 // pred_check
    _
  $region15: #{_lambda_.1} parent=0 // pred_check_branch
    %17 = sbr.rel (0) target = $region17
  $region16: #{_lambda_.1} parent=0 // pred_region
    _
  $region17: #{_lambda_.1} parent=0 // pred_fallthru
    _
  // Predicated region
  $region18: #{_lambda_.1} parent=0 // pred_check
    _
  $region19: #{_lambda_.1} parent=0 // pred_check_branch
    %19 = sbr.rel (0) target = $region21
  $region20: #{_lambda_.1} parent=0 // pred_region
    _
  $region21: #{_lambda_.1} parent=0 // pred_fallthru
    _
  %v20 = vld [vmem:[%s0] sm:$0xff]
  %v21 = vld [vmem:[%s0 + $0x8] sm:$0xff]
  %v22 = vld [vmem:[%s1] sm:$0xff]
  %v23 = vld [vmem:[%s1 + $0x8] sm:$0xff]
  %v24 = vadd.f32 %v20, %v22
  %v25 = vadd.f32 %v21, %v23
  %v26 = vld [vmem:[%s2] sm:$0xff]
  %v27 = vld [vmem:[%s2 + $0x8] sm:$0xff]
  %v28 = vadd.f32 %v24, %v26
  %v29 = vadd.f32 %v25, %v27
  %v30 = vld [vmem:[%s3] sm:$0x1]
  %v31 = vld [vmem:[%s4] sm:$0x1]
  %vm32 = vcmask 261120
  %v33 = vsel %vm32, %v28, 0.0
  %34 = vadd.xlane.f32.xlu0 %v33
  %v35 = vpop.xlane.xlu0 %34
  %v36 = vsel %vm32, %v29, 0.0
  %37 = vadd.xlane.f32.xlu0 %v36
  %v38 = vpop.xlane.xlu0 %37
  %v39 = vrcp.pop 32.0
  %v40 = vmul.f32 32.0, %v39
  %v41 = vsub.f32 1.0, %v40
  %v42 = vmul.f32 %v39, %v41
  %v43 = vadd.f32 %v39, %v42
  %vm44 = vweird.f32 %v39
  %v45 = vsel %vm44, %v39, %v43
  %v46 = vmul.f32 %v35, %v45
  %v47 = vmul.f32 %v38, %v45
  %v48 = vsub.f32 %v28, %v46
  %v49 = vsub.f32 %v29, %v47
  %v50 = vmul.f32 %v48, %v48
  %v51 = vmul.f32 %v49, %v49
  %v52 = vsel %vm32, %v50, 0.0
  %53 = vadd.xlane.f32.xlu0 %v52
  %v54 = vpop.xlane.xlu0 %53
  %v55 = vsel %vm32, %v51, 0.0
  %56 = vadd.xlane.f32.xlu0 %v55
  %v57 = vpop.xlane.xlu0 %56
  %v58 = vrcp.pop 31.0
  %v59 = vmul.f32 31.0, %v58
  %v60 = vsub.f32 1.0, %v59
  %v61 = vmul.f32 %v58, %v60
  %v62 = vadd.f32 %v58, %v61
  %vm63 = vweird.f32 %v58
  %v64 = vsel %vm63, %v58, %v62
  %v65 = vmul.f32 %v54, %v64
  %v66 = vmul.f32 %v57, %v64
  %v68 = vperm.slane %v30, 0
  %v70 = vmul.f32 %v68, %v48
  %v71 = vmul.f32 %v68, %v49
  %v72 = vrsqrt.pop %v65
  %v73 = vmul.f32 %v72, %v65
  %v74 = vmul.f32 %v73, %v72
  %v75 = vmul.f32 0.5, %v74
  %v76 = vsub.f32 1.5, %v75
  %v77 = vmul.f32 %v72, %v76
  %v78 = vmul.f32 %v65, %v77
  %vm79 = vcmp.eq.f32.partialorder %v65, inf
  %v80 = vsel %vm79, %v65, %v78
  %vm81 = vcmp.eq.f32.partialorder %v65, 0.0
  %v82 = vand.u32 %v65, 2147483648
  %v83 = vsel %vm81, %v82, %v80
  %v84 = vrsqrt.pop %v66
  %v85 = vmul.f32 %v84, %v66
  %v86 = vmul.f32 %v85, %v84
  %v87 = vmul.f32 0.5, %v86
  %v88 = vsub.f32 1.5, %v87
  %v89 = vmul.f32 %v84, %v88
  %v90 = vmul.f32 %v66, %v89
  %vm91 = vcmp.eq.f32.partialorder %v66, inf
  %v92 = vsel %vm91, %v66, %v90
  %vm93 = vcmp.eq.f32.partialorder %v66, 0.0
  %v94 = vand.u32 %v66, 2147483648
  %v95 = vsel %vm93, %v94, %v92
  %v96 = vadd.f32 %v83, 1e-06
  %v97 = vadd.f32 %v95, 1e-06
  %v98 = vrcp.pop %v96
  %v99 = vmul.f32 %v96, %v98
  %v100 = vsub.f32 1.0, %v99
  %v101 = vmul.f32 %v98, %v100
  %v102 = vadd.f32 %v98, %v101
  %vm103 = vweird.f32 %v96
  %vm104 = vweird.f32 %v98
  %vm105 = vmor %vm103, %vm104
  %v106 = vsel %vm105, %v98, %v102
  %v107 = vand.u32 2147483647, %v96
  %vm108 = vcmp.eq.f32.partialorder %v107, 8.507059e+37
  %v109 = vand.u32 %v96, 2147483648
  %v110 = vor.u32 1.1754944e-38, %v109
  %v111 = vsel %vm108, %v110, %v106
  %v112 = vmul.f32 %v70, %v111
  %v113 = vrcp.pop %v97
  %v114 = vmul.f32 %v97, %v113
  %v115 = vsub.f32 1.0, %v114
  %v116 = vmul.f32 %v113, %v115
  %v117 = vadd.f32 %v113, %v116
  %vm118 = vweird.f32 %v97
  %vm119 = vweird.f32 %v113
  %vm120 = vmor %vm118, %vm119
  %v121 = vsel %vm120, %v113, %v117
  %v122 = vand.u32 2147483647, %v97
  %vm123 = vcmp.eq.f32.partialorder %v122, 8.507059e+37
  %v124 = vand.u32 %v97, 2147483648
  %v125 = vor.u32 1.1754944e-38, %v124
  %v126 = vsel %vm123, %v125, %v121
  %v127 = vmul.f32 %v71, %v126
  %v129 = vperm.slane %v31, 0
  %v131 = vadd.f32 %v112, %v129
  %v132 = vadd.f32 %v127, %v129
  %v133 = vpack.c.bf16 %v131, %v131
  %v134 = vpack.c.bf16 %v132, %v132
  %vm135 = vcmask 257024
  %136 = vst.msk [vmem:[%s5] sm:$0xf] %vm135, %v133
  %137 = vst.msk [vmem:[%s5 + $0x4] sm:$0xf] %vm135, %v134
  // Predicated region
  $region22: #{_lambda_.1} parent=0 // pred_check
    _
  $region23: #{_lambda_.1} parent=0 // pred_check_branch
    %139 = sbr.rel (0) target = $region25
  $region24: #{_lambda_.1} parent=0 // pred_region
    _
  $region25: #{_lambda_.1} parent=0 // pred_fallthru
    _
  // Predicated region
  $region26: #{_lambda_.1} parent=0 // pred_check
    _
  $region27: #{_lambda_.1} parent=0 // pred_check_branch
    %141 = sbr.rel (0) target = $region29
  $region28: #{_lambda_.1} parent=0 // pred_region
    _
  $region29: #{_lambda_.1} parent=0 // pred_fallthru
    _

// kernel: closed_call.17
$region0: #{closed_call.17}
  #allocation0 [shape = 'u32[]', space=smem, size = 0x4, offset = 0x4, fixed_abs, tag = 'smem constant byte address 0x4 - core index']
  #allocation1 [shape = 'u32[72,128]{1,0:T(1,128)}', space=vmem, size = 0x9000, scoped, tag = 'internal scratch']
  %s0 = inlined_call_operand.vmem [shape: bf16[2,4,8,8], index: 0, kind: input, shape index: {}]
  %s1 = inlined_call_operand.vmem [shape: bf16[2,4,8,8], index: 1, kind: input, shape index: {}]
  %s2 = inlined_call_operand.vmem [shape: bf16[2,4,8,8], index: 2, kind: input, shape index: {}]
  %s3 = inlined_call_operand.vmem [shape: f32[2,1,8], index: 3, kind: input, shape index: {}]
  %s4 = inlined_call_operand.vmem [shape: bf16[2,4,8,8], index: 4, kind: output, shape index: {}]
  %s5 = sld [smem:[#allocation0]]
  $region49: #{closed_call.17} parent=0
    _
  %s7 = ssub.s32 1, %s5
  %s8 = scalar_select 0, %s7, %s5
  loop: start=0, step=1, limit=10
  $region2: #{closed_call.17} parent=0 // loop_pre_header
    _
  $region3: #{closed_call.17} parent=0 // loop_header
    %s10 = sphi 0, %s14
    %p11 = scmp.ge.s32.totalorder %s10, 10
    %s17 = sphi 0, %s36
    %s18 = sphi 0, %s32
    %s19 = sphi 0, %s28
    %s20 = sphi 0, %s17
    %s21 = sphi 0, %s18
    %s22 = sphi 0, %s19
    %s23 = sphi 0, %s20
    %s24 = sphi 0, %s21
    %s25 = sphi 0, %s22
    %s43 = sphi 0, %s45
    %s46 = sphi 0, %s43
    %s47 = sphi 0, %s46
    %s63 = sphi 0, %s47
    %s71 = sphi 0, %s73
    %s74 = sphi 0, %s71
    %s75 = sphi 0, %s74
    %s91 = sphi 0, %s75
    %s99 = sphi 0, %s101
    %s102 = sphi 0, %s99
    %s103 = sphi 0, %s102
    %s119 = sphi 0, %s103
    %s125 = sphi 0, %s127
    %s128 = sphi 0, %s125
    %s129 = sphi 0, %s128
    %s145 = sphi 0, %s129
    %s155 = sphi 0, %s157
    %s158 = sphi 0, %s155
    %s159 = sphi 0, %s158
    %s175 = sphi 0, %s159
  $region4: #{closed_call.17} parent=0 // loop_header_branch
    %13 = sbr.rel (%p11) target = $region8
  $region5: #{closed_call.17} parent=0 // loop_body
    %s15 = ssub.s32 %s10, 1
    %s16 = ssub.s32 %s10, 2
    %s26 = sadd.s32 1, %s19
    %p27 = scmp.ge.s32.totalorder %s26, 1
    %s28 = scalar_select %p27, 0, %s26
    %s29 = sadd.s32 1, %s18
    %s30 = scalar_select %p27, %s29, %s18
    %p31 = scmp.ge.s32.totalorder %s30, 4
    %s32 = scalar_select %p31, 0, %s30
    %s33 = sadd.s32 1, %s17
    %s34 = scalar_select %p31, %s33, %s17
    %p35 = scmp.ge.s32.totalorder %s34, 2
    %s36 = scalar_select %p35, 0, %s34
    %s37 = ssub.s32 %s17, %s36
    %s38 = ssub.s32 %s18, %s32
    %s39 = sor.u32 %s37, %s38
    %s40 = ssub.s32 %s19, %s28
    %s41 = sor.u32 %s39, %s40
    %p42 = scmp.eq.s32.totalorder %s41, 0
    %s44 = sadd.s32 %s43, 1
    %s45 = scalar_select %p42, %s43, %s44
    %p48 = pneg %p42
    %p49 = scmp.eq.s32.totalorder %s10, 7
    %p50 = por %p48, %p49
    %p51 = scmp.ne.s32.totalorder %s43, %s46
    %p52 = scmp.eq.s32.totalorder %s10, 0
    %p53 = por %p51, %p52
    %p54 = scmp.ne.s32.totalorder %s43, %s46
    %p55 = scmp.eq.s32.totalorder %s15, 7
    %p56 = por %p54, %p55
    %p57 = scmp.ne.s32.totalorder %s46, %s47
    %p58 = scmp.eq.s32.totalorder %s15, 0
    %p59 = por %p57, %p58
    %p60 = scmp.ne.s32.totalorder %s46, %s47
    %p61 = scmp.eq.s32.totalorder %s16, 7
    %p62 = por %p60, %p61
    %p64 = scmp.ne.s32.totalorder %s47, %s63
    %p65 = scmp.eq.s32.totalorder %s16, 0
    %p66 = por %p64, %p65
    %s67 = ssub.s32 %s17, %s36
    %s68 = ssub.s32 %s18, %s32
    %s69 = sor.u32 %s67, %s68
    %p70 = scmp.eq.s32.totalorder %s69, 0
    %s72 = sadd.s32 %s71, 1
    %s73 = scalar_select %p70, %s71, %s72
    %p76 = pneg %p70
    %p77 = scmp.eq.s32.totalorder %s10, 7
    %p78 = por %p76, %p77
    %p79 = scmp.ne.s32.totalorder %s71, %s74
    %p80 = scmp.eq.s32.totalorder %s10, 0
    %p81 = por %p79, %p80
    %p82 = scmp.ne.s32.totalorder %s71, %s74
    %p83 = scmp.eq.s32.totalorder %s15, 7
    %p84 = por %p82, %p83
    %p85 = scmp.ne.s32.totalorder %s74, %s75
    %p86 = scmp.eq.s32.totalorder %s15, 0
    %p87 = por %p85, %p86
    %p88 = scmp.ne.s32.totalorder %s74, %s75
    %p89 = scmp.eq.s32.totalorder %s16, 7
    %p90 = por %p88, %p89
    %p92 = scmp.ne.s32.totalorder %s75, %s91
    %p93 = scmp.eq.s32.totalorder %s16, 0
    %p94 = por %p92, %p93
    %s95 = ssub.s32 %s17, %s36
    %s96 = ssub.s32 %s18, %s32
    %s97 = sor.u32 %s95, %s96
    %p98 = scmp.eq.s32.totalorder %s97, 0
    %s100 = sadd.s32 %s99, 1
    %s101 = scalar_select %p98, %s99, %s100
    %p104 = pneg %p98
    %p105 = scmp.eq.s32.totalorder %s10, 7
    %p106 = por %p104, %p105
    %p107 = scmp.ne.s32.totalorder %s99, %s102
    %p108 = scmp.eq.s32.totalorder %s10, 0
    %p109 = por %p107, %p108
    %p110 = scmp.ne.s32.totalorder %s99, %s102
    %p111 = scmp.eq.s32.totalorder %s15, 7
    %p112 = por %p110, %p111
    %p113 = scmp.ne.s32.totalorder %s102, %s103
    %p114 = scmp.eq.s32.totalorder %s15, 0
    %p115 = por %p113, %p114
    %p116 = scmp.ne.s32.totalorder %s102, %s103
    %p117 = scmp.eq.s32.totalorder %s16, 7
    %p118 = por %p116, %p117
    %p120 = scmp.ne.s32.totalorder %s103, %s119
    %p121 = scmp.eq.s32.totalorder %s16, 0
    %p122 = por %p120, %p121
    %s123 = ssub.s32 %s17, %s36
    %p124 = scmp.eq.s32.totalorder %s123, 0
    %s126 = sadd.s32 %s125, 1
    %s127 = scalar_select %p124, %s125, %s126
    %p130 = pneg %p124
    %p131 = scmp.eq.s32.totalorder %s10, 7
    %p132 = por %p130, %p131
    %p133 = scmp.ne.s32.totalorder %s125, %s128
    %p134 = scmp.eq.s32.totalorder %s10, 0
    %p135 = por %p133, %p134
    %p136 = scmp.ne.s32.totalorder %s125, %s128
    %p137 = scmp.eq.s32.totalorder %s15, 7
    %p138 = por %p136, %p137
    %p139 = scmp.ne.s32.totalorder %s128, %s129
    %p140 = scmp.eq.s32.totalorder %s15, 0
    %p141 = por %p139, %p140
    %p142 = scmp.ne.s32.totalorder %s128, %s129
    %p143 = scmp.eq.s32.totalorder %s16, 7
    %p144 = por %p142, %p143
    %p146 = scmp.ne.s32.totalorder %s129, %s145
    %p147 = scmp.eq.s32.totalorder %s16, 0
    %p148 = por %p146, %p147
    %s149 = ssub.s32 %s17, %s36
    %s150 = ssub.s32 %s18, %s32
    %s151 = sor.u32 %s149, %s150
    %s152 = ssub.s32 %s19, %s28
    %s153 = sor.u32 %s151, %s152
    %p154 = scmp.eq.s32.totalorder %s153, 0
    %s156 = sadd.s32 %s155, 1
    %s157 = scalar_select %p154, %s155, %s156
    %p160 = pneg %p154
    %p161 = scmp.eq.s32.totalorder %s10, 7
    %p162 = por %p160, %p161
    %p163 = scmp.ne.s32.totalorder %s155, %s158
    %p164 = scmp.eq.s32.totalorder %s10, 0
    %p165 = por %p163, %p164
    %p166 = scmp.ne.s32.totalorder %s155, %s158
    %p167 = scmp.eq.s32.totalorder %s15, 7
    %p168 = por %p166, %p167
    %p169 = scmp.ne.s32.totalorder %s158, %s159
    %p170 = scmp.eq.s32.totalorder %s15, 0
    %p171 = por %p169, %p170
    %p172 = scmp.ne.s32.totalorder %s158, %s159
    %p173 = scmp.eq.s32.totalorder %s16, 7
    %p174 = por %p172, %p173
    %p176 = scmp.ne.s32.totalorder %s159, %s175
    %p177 = scmp.eq.s32.totalorder %s16, 0
    %p178 = por %p176, %p177
    %p179 = scmp.le.s32.totalorder 1, %s10
    %p180 = scmp.lt.s32.totalorder %s10, 9
    %p181 = pnand %p179, %p180
    %p182 = pneg %p181
    // Predicated region
    $region9: #{closed_call.17} parent=5 // pred_check
      _
    $region10: #{closed_call.17} parent=5 // pred_check_branch
      %184 = sbr.rel (%p181) target = $region12
    $region11: #{closed_call.17} parent=5 // pred_region
      %s185 = ssub.s32 %s10, 1
    $region12: #{closed_call.17} parent=5 // pred_fallthru
      _
    %p186 = scmp.lt.s32.totalorder %s10, 8
    // Predicated region
    $region13: #{closed_call.17} parent=5 // pred_check
      %p187 = pneg %p186
    $region14: #{closed_call.17} parent=5 // pred_check_branch
      %189 = sbr.rel (%p187) target = $region16
    $region15: #{closed_call.17} parent=5 // pred_region
      // Predicated region
      $region17: #{closed_call.17} parent=15 // pred_check
        %p190 = pneg %p53
      $region18: #{closed_call.17} parent=15 // pred_check_branch
        %192 = sbr.rel (%p190) target = $region20
      $region19: #{closed_call.17} parent=15 // pred_region
        %p193 = scmp.lt.s32.totalorder %s17, 1
        %s194 = scalar_select %p193, %s17, 1
        %p195 = scmp.lt.s32.totalorder %s18, 3
        %s196 = scalar_select %p195, %s18, 3
        %p197 = scmp.lt.s32.totalorder %s19, 0
        %s198 = scalar_select %p197, %s19, 0
        %s199 = sadd.s32 %s198, %s196
        %s200 = smul.addr %s194, 4
        %s201 = sadd.s32 %s199, %s200
        %s202 = smul.addr %s201, 4
        %s203 = scalar_lea.vmem %s0, %s202
      $region20: #{closed_call.17} parent=15 // pred_fallthru
        _
      // Predicated region
      $region21: #{closed_call.17} parent=15 // pred_check
        %p204 = pneg %p81
      $region22: #{closed_call.17} parent=15 // pred_check_branch
        %206 = sbr.rel (%p204) target = $region24
      $region23: #{closed_call.17} parent=15 // pred_region
        %p207 = scmp.lt.s32.totalorder %s17, 1
        %s208 = scalar_select %p207, %s17, 1
        %p209 = scmp.lt.s32.totalorder %s18, 3
        %s210 = scalar_select %p209, %s18, 3
        %s211 = smul.addr %s208, 4
        %s212 = sadd.s32 %s210, %s211
        %s213 = smul.addr %s212, 4
        %s214 = scalar_lea.vmem %s1, %s213
      $region24: #{closed_call.17} parent=15 // pred_fallthru
        _
      // Predicated region
      $region25: #{closed_call.17} parent=15 // pred_check
        %p215 = pneg %p109
      $region26: #{closed_call.17} parent=15 // pred_check_branch
        %217 = sbr.rel (%p215) target = $region28
      $region27: #{closed_call.17} parent=15 // pred_region
        %p218 = scmp.lt.s32.totalorder %s17, 1
        %s219 = scalar_select %p218, %s17, 1
        %p220 = scmp.lt.s32.totalorder %s18, 3
        %s221 = scalar_select %p220, %s18, 3
        %s222 = smul.addr %s219, 4
        %s223 = sadd.s32 %s221, %s222
        %s224 = smul.addr %s223, 4
        %s225 = scalar_lea.vmem %s2, %s224
      $region28: #{closed_call.17} parent=15 // pred_fallthru
        _
      // Predicated region
      $region29: #{closed_call.17} parent=15 // pred_check
        %p226 = pneg %p135
      $region30: #{closed_call.17} parent=15 // pred_check_branch
        %228 = sbr.rel (%p226) target = $region32
      $region31: #{closed_call.17} parent=15 // pred_region
        %p229 = scmp.lt.s32.totalorder %s17, 1
        %s230 = scalar_select %p229, %s17, 1
        %s231 = scalar_lea.vmem %s3, %s230
      $region32: #{closed_call.17} parent=15 // pred_fallthru
        _
    $region16: #{closed_call.17} parent=5 // pred_fallthru
      _
    %p232 = scmp.le.s32.totalorder 1, %s10
    %p233 = scmp.lt.s32.totalorder %s10, 9
    %p234 = pnand %p232, %p233
    %p235 = pneg %p234
    // Predicated region
    $region33: #{closed_call.17} parent=5 // pred_check
      _
    $region34: #{closed_call.17} parent=5 // pred_check_branch
      %237 = sbr.rel (%p234) target = $region36
    $region35: #{closed_call.17} parent=5 // pred_region
      %s238 = ssub.s32 %s10, 1
      %p239 = scmp.lt.s32.totalorder %s20, 1
      %s240 = scalar_select %p239, %s20, 1
      %p241 = scmp.lt.s32.totalorder %s21, 3
      %s242 = scalar_select %p241, %s21, 3
      %p243 = scmp.lt.s32.totalorder %s22, 0
      %s244 = scalar_select %p243, %s22, 0
      %s245 = sadd.s32 %s244, %s242
      %s246 = smul.addr %s240, 4
      %s247 = sadd.s32 %s245, %s246
      %s248 = smul.addr %s247, 4
      %s249 = scalar_lea.vmem %s0, %s248
      %p250 = pneg %p59
      %p251 = pneg %p56
      %p252 = scmp.lt.s32.totalorder %s20, 1
      %s253 = scalar_select %p252, %s20, 1
      %p254 = scmp.lt.s32.totalorder %s21, 3
      %s255 = scalar_select %p254, %s21, 3
      %s256 = smul.addr %s253, 4
      %s257 = sadd.s32 %s255, %s256
      %s258 = smul.addr %s257, 4
      %s259 = scalar_lea.vmem %s1, %s258
      %p260 = pneg %p87
      %p261 = pneg %p84
      %p262 = scmp.lt.s32.totalorder %s20, 1
      %s263 = scalar_select %p262, %s20, 1
      %p264 = scmp.lt.s32.totalorder %s21, 3
      %s265 = scalar_select %p264, %s21, 3
      %s266 = smul.addr %s263, 4
      %s267 = sadd.s32 %s265, %s266
      %s268 = smul.addr %s267, 4
      %s269 = scalar_lea.vmem %s2, %s268
      %p270 = pneg %p115
      %p271 = pneg %p112
      %p272 = scmp.lt.s32.totalorder %s20, 1
      %s273 = scalar_select %p272, %s20, 1
      %s274 = scalar_lea.vmem %s3, %s273
      %p275 = pneg %p141
      %p276 = pneg %p138
      %p277 = pneg %p171
      %p278 = pneg %p168
      %p279 = scmp.lt.s32.totalorder %s20, 1
      %s280 = scalar_select %p279, %s20, 1
      %p281 = scmp.lt.s32.totalorder %s21, 3
      %s282 = scalar_select %p281, %s21, 3
      %p283 = scmp.lt.s32.totalorder %s22, 0
      %s284 = scalar_select %p283, %s22, 0
      %s285 = sadd.s32 %s284, %s282
      %s286 = smul.addr %s280, 4
      %s287 = sadd.s32 %s285, %s286
      %s288 = smul.addr %s287, 4
      %s289 = scalar_lea.vmem %s4, %s288
      %p290 = scmp.lt.s32.totalorder %s20, 1
      %s291 = scalar_select %p290, %s20, 1
      %p292 = scmp.lt.s32.totalorder %s21, 3
      %s293 = scalar_select %p292, %s21, 3
      %p294 = scmp.lt.s32.totalorder %s22, 0
      %s295 = scalar_select %p294, %s22, 0
      %s296 = sadd.s32 %s295, %s293
      %s297 = smul.addr %s291, 4
      %s298 = sadd.s32 %s296, %s297
      %s299 = smul.addr %s298, 4
      %s300 = scalar_lea.vmem %s0, %s299
      %p301 = scmp.lt.s32.totalorder %s20, 1
      %s302 = scalar_select %p301, %s20, 1
      %p303 = scmp.lt.s32.totalorder %s21, 3
      %s304 = scalar_select %p303, %s21, 3
      %s305 = smul.addr %s302, 4
      %s306 = sadd.s32 %s304, %s305
      %s307 = smul.addr %s306, 4
      %s308 = scalar_lea.vmem %s1, %s307
      %p309 = scmp.lt.s32.totalorder %s20, 1
      %s310 = scalar_select %p309, %s20, 1
      %p311 = scmp.lt.s32.totalorder %s21, 3
      %s312 = scalar_select %p311, %s21, 3
      %s313 = smul.addr %s310, 4
      %s314 = sadd.s32 %s312, %s313
      %s315 = smul.addr %s314, 4
      %s316 = scalar_lea.vmem %s2, %s315
      %p317 = scmp.lt.s32.totalorder %s20, 1
      %s318 = scalar_select %p317, %s20, 1
      %s319 = scalar_lea.vmem %s3, %s318
      %p320 = scmp.lt.s32.totalorder %s20, 1
      %s321 = scalar_select %p320, %s20, 1
      %p322 = scmp.lt.s32.totalorder %s21, 3
      %s323 = scalar_select %p322, %s21, 3
      %p324 = scmp.lt.s32.totalorder %s22, 0
      %s325 = scalar_select %p324, %s22, 0
      %s326 = sadd.s32 %s325, %s323
      %s327 = smul.addr %s321, 4
      %s328 = sadd.s32 %s326, %s327
      %s329 = smul.addr %s328, 4
      %s330 = scalar_lea.vmem %s4, %s329
      %v332 = vld [vmem:[%s300] sm:$0xf]
      %v333 = vld [vmem:[%s308] sm:$0xf]
      %v334 = vld [vmem:[%s316] sm:$0xf]
      %vm335 = vcmask 64512
      %v337 = vsel %vm335, %v332, 0
      %v340 = vsel %vm335, %v333, 0
      %342 = vmatpush.bf16.xpose.msra.mxu0 0
      %343 = vmatpush.bf16.xpose.msra.mxu0 0
      %344 = vmatpush.bf16.xpose.msra.mxu0 0
      %345 = vmatpush.bf16.xpose.msra.mxu0 0
      %346 = vmatpush.bf16.xpose.msra.mxu0 0
      %347 = vmatpush.bf16.xpose.msra.mxu0 0
      %348 = vmatpush.bf16.xpose.msra.mxu0 0
      %349 = vmatpush.bf16.xpose.msra.mxu0 %v340
      %350 = vmatmul.bf16.gmra.mxu0 %v337
      %v351 = vpop.f32.mrf.mxu0
      %v352 = vadd.f32 0.0, %v351
      %v353 = vpop.f32.mrf.mxu0
      %354 = vdwg.mxu0
      %v355 = vmul.f32 %v352, 0.35355338
      %v356 = vld [vmem:[%s319] sm:$0x1]
      %vm357 = vcmp.eq.f32.partialorder %v356, 0.0
      %v358 = vsel %vm357, 1, 0
      %v359 = vperm.slane %v358, 0
      %vm360 = vcmp.eq.s32.totalorder %v359, 1
      %v361 = vsel %vm360, -1e+09, %v355
      %v362 = vsel %vm335, %v361, -inf
      %363 = vmax.xlane.f32.xlu0 %v362
      %v364 = vpop.xlane.xlu0 %363
      %v365 = vsub.f32 %v361, %v364
      %v366 = vmul.f32 %v365, 1.442695
      %v367 = vpow.pop %v366
      %v368 = vsel %vm335, %v367, 0.0
      %369 = vadd.xlane.f32.xlu0 %v368
      %v370 = vpop.xlane.xlu0 %369
      %v371 = vrcp.pop %v370
      %v372 = vmul.f32 %v367, %v371
      %v373 = vpack.c.bf16 %v372, %v372
      %v375 = vsel %vm335, %v373, 0
      %vm377 = vcmask 1043456
      %v379 = vsel %vm377, %v334, 0
      %381 = vmatpush.bf16.msra.mxu0 0
      %382 = vmatpush.bf16.msra.mxu0 0
      %383 = vmatpush.bf16.msra.mxu0 0
      %384 = vmatpush.bf16.msra.mxu0 0
      %385 = vmatpush.bf16.msra.mxu0 0
      %386 = vmatpush.bf16.msra.mxu0 0
      %387 = vmatpush.bf16.msra.mxu0 0
      %388 = vmatpush.bf16.msra.mxu0 %v379
      %389 = vmatmul.bf16.gmra.mxu0 %v375
      %v390 = vpop.f32.mrf.mxu0
      %v391 = vadd.f32 0.0, %v390
      %v392 = vpop.f32.mrf.mxu0
      %393 = vdwg.mxu0
      %v394 = vpack.c.bf16 %v391, %v391
      %vm395 = vcmask 60416
      %396 = vst.msk [vmem:[%s330] sm:$0xf] %vm395, %v394
      %p397 = scmp.lt.s32.totalorder %s20, 1
      %s398 = scalar_select %p397, %s20, 1
      %p399 = scmp.lt.s32.totalorder %s21, 3
      %s400 = scalar_select %p399, %s21, 3
      %p401 = scmp.lt.s32.totalorder %s22, 0
      %s402 = scalar_select %p401, %s22, 0
      %s403 = sadd.s32 %s402, %s400
      %s404 = smul.addr %s398, 4
      %s405 = sadd.s32 %s403, %s404
      %s406 = smul.addr %s405, 4
      %s407 = scalar_lea.vmem %s4, %s406
      // Predicated region
      $region37: #{closed_call.17} parent=35 // pred_check
        %p408 = pneg %p168
      $region38: #{closed_call.17} parent=35 // pred_check_branch
        %410 = sbr.rel (%p408) target = $region40
      $region39: #{closed_call.17} parent=35 // pred_region
        _
      $region40: #{closed_call.17} parent=35 // pred_fallthru
        _
    $region36: #{closed_call.17} parent=5 // pred_fallthru
      _
    %p411 = scmp.le.s32.totalorder 2, %s10
    // Predicated region
    $region41: #{closed_call.17} parent=5 // pred_check
      %p412 = pneg %p411
    $region42: #{closed_call.17} parent=5 // pred_check_branch
      %414 = sbr.rel (%p412) target = $region44
    $region43: #{closed_call.17} parent=5 // pred_region
      %s415 = ssub.s32 %s10, 2
      // Predicated region
      $region45: #{closed_call.17} parent=43 // pred_check
        %p416 = pneg %p174
      $region46: #{closed_call.17} parent=43 // pred_check_branch
        %418 = sbr.rel (%p416) target = $region48
      $region47: #{closed_call.17} parent=43 // pred_region
        %p419 = scmp.lt.s32.totalorder %s23, 1
        %s420 = scalar_select %p419, %s23, 1
        %p421 = scmp.lt.s32.totalorder %s24, 3
        %s422 = scalar_select %p421, %s24, 3
        %p423 = scmp.lt.s32.totalorder %s25, 0
        %s424 = scalar_select %p423, %s25, 0
        %s425 = sadd.s32 %s424, %s422
        %s426 = smul.addr %s420, 4
        %s427 = sadd.s32 %s425, %s426
        %s428 = smul.addr %s427, 4
        %s429 = scalar_lea.vmem %s4, %s428
      $region48: #{closed_call.17} parent=43 // pred_fallthru
        _
    $region44: #{closed_call.17} parent=5 // pred_fallthru
      _
  $region6: #{closed_call.17} parent=0 // loop_footer
    %s14 = sadd.s32 1, %s10
  $region7: #{closed_call.17} parent=0 // loop_footer_branch
    %9 = sbr.rel target = $region3
  $region8: #{closed_call.17} parent=0 // loop_exit
    _

// kernel: closed_call.16
$region0: #{closed_call.16}
  #allocation0 [shape = 'u32[]', space=smem, size = 0x4, offset = 0x4, fixed_abs, tag = 'smem constant byte address 0x4 - core index']
  #allocation1 [shape = 'u32[72,128]{1,0:T(1,128)}', space=vmem, size = 0x9000, scoped, tag = 'internal scratch']
  %s0 = inlined_call_operand.vmem [shape: bf16[16,32], index: 0, kind: input, shape index: {}]
  %s1 = inlined_call_operand.vmem [shape: bf16[32,96], index: 1, kind: input, shape index: {}]
  %s2 = inlined_call_operand.vmem [shape: f32[1,96], index: 2, kind: input, shape index: {}]
  %s3 = inlined_call_operand.vmem [shape: bf16[16,96], index: 3, kind: output, shape index: {}]
  %s4 = sld [smem:[#allocation0]]
  $region22: #{closed_call.16} parent=0
    _
  %s6 = ssub.s32 1, %s4
  %s7 = scalar_select 0, %s6, %s4
  // Predicated region
  $region2: #{closed_call.16} parent=0 // pred_check
    _
  $region3: #{closed_call.16} parent=0 // pred_check_branch
    %9 = sbr.rel (0) target = $region5
  $region4: #{closed_call.16} parent=0 // pred_region
    _
  $region5: #{closed_call.16} parent=0 // pred_fallthru
    _
  // Predicated region
  $region6: #{closed_call.16} parent=0 // pred_check
    _
  $region7: #{closed_call.16} parent=0 // pred_check_branch
    %11 = sbr.rel (0) target = $region9
  $region8: #{closed_call.16} parent=0 // pred_region
    _
  $region9: #{closed_call.16} parent=0 // pred_fallthru
    _
  // Predicated region
  $region10: #{closed_call.16} parent=0 // pred_check
    _
  $region11: #{closed_call.16} parent=0 // pred_check_branch
    %13 = sbr.rel (0) target = $region13
  $region12: #{closed_call.16} parent=0 // pred_region
    _
  $region13: #{closed_call.16} parent=0 // pred_fallthru
    _
  %v15 = vld [vmem:[%s0] sm:$0xf]
  %v16 = vld [vmem:[%s0 + $0x4] sm:$0xf]
  %v17 = vld [vmem:[%s1] sm:$0xf]
  %v18 = vld [vmem:[%s1 + $0x4] sm:$0xf]
  %v19 = vld [vmem:[%s1 + $0x8] sm:$0xf]
  %v20 = vld [vmem:[%s1 + $0xc] sm:$0xf]
  %v21 = vld [vmem:[%s2] sm:$0x1]
  %v23 = vperm.slane %v21, 0
  %v27 = vunpack.c.l.b16 %v15
  %v28 = vunpack.c.l.b16 %v16
  %v29 = vpack.c.b16 %v28, %v27
  %v34 = vunpack.c.l.b16 %v17
  %v35 = vunpack.c.l.b16 %v18
  %v36 = vunpack.c.l.b16 %v19
  %v37 = vunpack.c.l.b16 %v20
  %v38 = vpack.c.b16 %v35, %v34
  %v39 = vpack.c.b16 %v37, %v36
  %vm42 = vcmask 261120
  %v44 = vsel %vm42, %v29, 0
  %46 = vmatpush.bf16.msra.mxu0 0
  %47 = vmatpush.bf16.msra.mxu0 0
  %48 = vmatpush.bf16.msra.mxu0 0
  %49 = vmatpush.bf16.msra.mxu0 0
  %50 = vmatpush.bf16.msra.mxu0 0
  %51 = vmatpush.bf16.msra.mxu0 0
  %52 = vmatpush.bf16.msra.mxu0 %v39
  %53 = vmatpush.bf16.msra.mxu0 %v38
  %54 = vmatmul.bf16.gmra.mxu0 %v44
  %v55 = vpop.f32.mrf.mxu0
  %v56 = vadd.f32 %v23, %v55
  %v57 = vpop.f32.mrf.mxu0
  %v58 = vadd.f32 %v23, %v57
  %59 = vdwg.mxu0
  %v60 = vpack.c.bf16 %v56, %v56
  %v61 = vpack.c.bf16 %v58, %v58
  %vm62 = vcmask 781312
  %63 = vst.msk [vmem:[%s3] sm:$0xf] %vm62, %v60
  %64 = vst.msk [vmem:[%s3 + $0x4] sm:$0xf] %vm62, %v61
  // Predicated region
  $region14: #{closed_call.16} parent=0 // pred_check
    _
  $region15: #{closed_call.16} parent=0 // pred_check_branch
    %66 = sbr.rel (0) target = $region17
  $region16: #{closed_call.16} parent=0 // pred_region
    _
  $region17: #{closed_call.16} parent=0 // pred_fallthru
    _
  // Predicated region
  $region18: #{closed_call.16} parent=0 // pred_check
    _
  $region19: #{closed_call.16} parent=0 // pred_check_branch
    %68 = sbr.rel (0) target = $region21
  $region20: #{closed_call.16} parent=0 // pred_region
    _
  $region21: #{closed_call.16} parent=0 // pred_fallthru
    _

// kernel: closed_call.18
$region0: #{closed_call.18}
  #allocation0 [shape = 'u32[]', space=smem, size = 0x4, offset = 0x4, fixed_abs, tag = 'smem constant byte address 0x4 - core index']
  #allocation1 [shape = 'u32[72,128]{1,0:T(1,128)}', space=vmem, size = 0x9000, scoped, tag = 'internal scratch']
  %s0 = inlined_call_operand.vmem [shape: bf16[16,32], index: 0, kind: input, shape index: {}]
  %s1 = inlined_call_operand.vmem [shape: bf16[32,32], index: 1, kind: input, shape index: {}]
  %s2 = inlined_call_operand.vmem [shape: f32[1,32], index: 2, kind: input, shape index: {}]
  %s3 = inlined_call_operand.vmem [shape: bf16[16,32], index: 3, kind: input, shape index: {}]
  %s4 = inlined_call_operand.vmem [shape: f32[1,32], index: 4, kind: input, shape index: {}]
  %s5 = inlined_call_operand.vmem [shape: f32[1,32], index: 5, kind: input, shape index: {}]
  %s6 = inlined_call_operand.vmem [shape: bf16[16,32], index: 6, kind: output, shape index: {}]
  %s7 = sld [smem:[#allocation0]]
  $region34: #{closed_call.18} parent=0
    _
  %s9 = ssub.s32 1, %s7
  %s10 = scalar_select 0, %s9, %s7
  // Predicated region
  $region2: #{closed_call.18} parent=0 // pred_check
    _
  $region3: #{closed_call.18} parent=0 // pred_check_branch
    %12 = sbr.rel (0) target = $region5
  $region4: #{closed_call.18} parent=0 // pred_region
    _
  $region5: #{closed_call.18} parent=0 // pred_fallthru
    _
  // Predicated region
  $region6: #{closed_call.18} parent=0 // pred_check
    _
  $region7: #{closed_call.18} parent=0 // pred_check_branch
    %14 = sbr.rel (0) target = $region9
  $region8: #{closed_call.18} parent=0 // pred_region
    _
  $region9: #{closed_call.18} parent=0 // pred_fallthru
    _
  // Predicated region
  $region10: #{closed_call.18} parent=0 // pred_check
    _
  $region11: #{closed_call.18} parent=0 // pred_check_branch
    %16 = sbr.rel (0) target = $region13
  $region12: #{closed_call.18} parent=0 // pred_region
    _
  $region13: #{closed_call.18} parent=0 // pred_fallthru
    _
  // Predicated region
  $region14: #{closed_call.18} parent=0 // pred_check
    _
  $region15: #{closed_call.18} parent=0 // pred_check_branch
    %18 = sbr.rel (0) target = $region17
  $region16: #{closed_call.18} parent=0 // pred_region
    _
  $region17: #{closed_call.18} parent=0 // pred_fallthru
    _
  // Predicated region
  $region18: #{closed_call.18} parent=0 // pred_check
    _
  $region19: #{closed_call.18} parent=0 // pred_check_branch
    %20 = sbr.rel (0) target = $region21
  $region20: #{closed_call.18} parent=0 // pred_region
    _
  $region21: #{closed_call.18} parent=0 // pred_fallthru
    _
  // Predicated region
  $region22: #{closed_call.18} parent=0 // pred_check
    _
  $region23: #{closed_call.18} parent=0 // pred_check_branch
    %22 = sbr.rel (0) target = $region25
  $region24: #{closed_call.18} parent=0 // pred_region
    _
  $region25: #{closed_call.18} parent=0 // pred_fallthru
    _
  %v24 = vld [vmem:[%s0] sm:$0xf]
  %v25 = vld [vmem:[%s0 + $0x4] sm:$0xf]
  %v26 = vld [vmem:[%s1] sm:$0xf]
  %v27 = vld [vmem:[%s1 + $0x4] sm:$0xf]
  %v28 = vld [vmem:[%s1 + $0x8] sm:$0xf]
  %v29 = vld [vmem:[%s1 + $0xc] sm:$0xf]
  %v32 = vunpack.c.l.b16 %v24
  %v33 = vunpack.c.l.b16 %v25
  %v34 = vpack.c.b16 %v33, %v32
  %v39 = vunpack.c.l.b16 %v26
  %v40 = vunpack.c.l.b16 %v27
  %v41 = vunpack.c.l.b16 %v28
  %v42 = vunpack.c.l.b16 %v29
  %v43 = vpack.c.b16 %v40, %v39
  %v44 = vpack.c.b16 %v42, %v41
  %vm47 = vcmask 261120
  %v49 = vsel %vm47, %v34, 0
  %51 = vmatpush.bf16.msra.mxu0 0
  %52 = vmatpush.bf16.msra.mxu0 0
  %53 = vmatpush.bf16.msra.mxu0 0
  %54 = vmatpush.bf16.msra.mxu0 0
  %55 = vmatpush.bf16.msra.mxu0 0
  %56 = vmatpush.bf16.msra.mxu0 0
  %57 = vmatpush.bf16.msra.mxu0 %v44
  %58 = vmatpush.bf16.msra.mxu0 %v43
  %59 = vmatmul.bf16.gmra.mxu0 %v49
  %v60 = vpop.f32.mrf.mxu0
  %v61 = vadd.f32 0.0, %v60
  %v62 = vpop.f32.mrf.mxu0
  %v63 = vadd.f32 0.0, %v62
  %64 = vdwg.mxu0
  %v65 = vld [vmem:[%s3] sm:$0xf]
  %v66 = vld [vmem:[%s3 + $0x4] sm:$0xf]
  %v67 = vunpack.c.l.bf16 %v65
  %v68 = vunpack.c.l.bf16 %v66
  %v69 = vadd.f32 %v67, %v61
  %v70 = vadd.f32 %v68, %v63
  %v71 = vld [vmem:[%s2] sm:$0x1]
  %v73 = vperm.slane %v71, 0
  %v75 = vadd.f32 %v69, %v73
  %v76 = vadd.f32 %v70, %v73
  %v77 = vld [vmem:[%s4] sm:$0x1]
  %v78 = vld [vmem:[%s5] sm:$0x1]
  %v79 = vsel %vm47, %v75, 0.0
  %80 = vadd.xlane.f32.xlu0 %v79
  %v81 = vpop.xlane.xlu0 %80
  %v82 = vsel %vm47, %v76, 0.0
  %83 = vadd.xlane.f32.xlu0 %v82
  %v84 = vpop.xlane.xlu0 %83
  %v85 = vrcp.pop 32.0
  %v86 = vmul.f32 32.0, %v85
  %v87 = vsub.f32 1.0, %v86
  %v88 = vmul.f32 %v85, %v87
  %v89 = vadd.f32 %v85, %v88
  %vm90 = vweird.f32 %v85
  %v91 = vsel %vm90, %v85, %v89
  %v92 = vmul.f32 %v81, %v91
  %v93 = vmul.f32 %v84, %v91
  %v94 = vsub.f32 %v75, %v92
  %v95 = vsub.f32 %v76, %v93
  %v96 = vmul.f32 %v94, %v94
  %v97 = vmul.f32 %v95, %v95
  %v98 = vsel %vm47, %v96, 0.0
  %99 = vadd.xlane.f32.xlu0 %v98
  %v100 = vpop.xlane.xlu0 %99
  %v101 = vsel %vm47, %v97, 0.0
  %102 = vadd.xlane.f32.xlu0 %v101
  %v103 = vpop.xlane.xlu0 %102
  %v104 = vrcp.pop 31.0
  %v105 = vmul.f32 31.0, %v104
  %v106 = vsub.f32 1.0, %v105
  %v107 = vmul.f32 %v104, %v106
  %v108 = vadd.f32 %v104, %v107
  %vm109 = vweird.f32 %v104
  %v110 = vsel %vm109, %v104, %v108
  %v111 = vmul.f32 %v100, %v110
  %v112 = vmul.f32 %v103, %v110
  %v114 = vperm.slane %v77, 0
  %v116 = vmul.f32 %v114, %v94
  %v117 = vmul.f32 %v114, %v95
  %v118 = vrsqrt.pop %v111
  %v119 = vmul.f32 %v118, %v111
  %v120 = vmul.f32 %v119, %v118
  %v121 = vmul.f32 0.5, %v120
  %v122 = vsub.f32 1.5, %v121
  %v123 = vmul.f32 %v118, %v122
  %v124 = vmul.f32 %v111, %v123
  %vm125 = vcmp.eq.f32.partialorder %v111, inf
  %v126 = vsel %vm125, %v111, %v124
  %vm127 = vcmp.eq.f32.partialorder %v111, 0.0
  %v128 = vand.u32 %v111, 2147483648
  %v129 = vsel %vm127, %v128, %v126
  %v130 = vrsqrt.pop %v112
  %v131 = vmul.f32 %v130, %v112
  %v132 = vmul.f32 %v131, %v130
  %v133 = vmul.f32 0.5, %v132
  %v134 = vsub.f32 1.5, %v133
  %v135 = vmul.f32 %v130, %v134
  %v136 = vmul.f32 %v112, %v135
  %vm137 = vcmp.eq.f32.partialorder %v112, inf
  %v138 = vsel %vm137, %v112, %v136
  %vm139 = vcmp.eq.f32.partialorder %v112, 0.0
  %v140 = vand.u32 %v112, 2147483648
  %v141 = vsel %vm139, %v140, %v138
  %v142 = vadd.f32 %v129, 1e-06
  %v143 = vadd.f32 %v141, 1e-06
  %v144 = vrcp.pop %v142
  %v145 = vmul.f32 %v142, %v144
  %v146 = vsub.f32 1.0, %v145
  %v147 = vmul.f32 %v144, %v146
  %v148 = vadd.f32 %v144, %v147
  %vm149 = vweird.f32 %v142
  %vm150 = vweird.f32 %v144
  %vm151 = vmor %vm149, %vm150
  %v152 = vsel %vm151, %v144, %v148
  %v153 = vand.u32 2147483647, %v142
  %vm154 = vcmp.eq.f32.partialorder %v153, 8.507059e+37
  %v155 = vand.u32 %v142, 2147483648
  %v156 = vor.u32 1.1754944e-38, %v155
  %v157 = vsel %vm154, %v156, %v152
  %v158 = vmul.f32 %v116, %v157
  %v159 = vrcp.pop %v143
  %v160 = vmul.f32 %v143, %v159
  %v161 = vsub.f32 1.0, %v160
  %v162 = vmul.f32 %v159, %v161
  %v163 = vadd.f32 %v159, %v162
  %vm164 = vweird.f32 %v143
  %vm165 = vweird.f32 %v159
  %vm166 = vmor %vm164, %vm165
  %v167 = vsel %vm166, %v159, %v163
  %v168 = vand.u32 2147483647, %v143
  %vm169 = vcmp.eq.f32.partialorder %v168, 8.507059e+37
  %v170 = vand.u32 %v143, 2147483648
  %v171 = vor.u32 1.1754944e-38, %v170
  %v172 = vsel %vm169, %v171, %v167
  %v173 = vmul.f32 %v117, %v172
  %v175 = vperm.slane %v78, 0
  %v177 = vadd.f32 %v158, %v175
  %v178 = vadd.f32 %v173, %v175
  %v179 = vpack.c.bf16 %v177, %v177
  %v180 = vpack.c.bf16 %v178, %v178
  %vm181 = vcmask 257024
  %182 = vst.msk [vmem:[%s6] sm:$0xf] %vm181, %v179
  %183 = vst.msk [vmem:[%s6 + $0x4] sm:$0xf] %vm181, %v180
  // Predicated region
  $region26: #{closed_call.18} parent=0 // pred_check
    _
  $region27: #{closed_call.18} parent=0 // pred_check_branch
    %185 = sbr.rel (0) target = $region29
  $region28: #{closed_call.18} parent=0 // pred_region
    _
  $region29: #{closed_call.18} parent=0 // pred_fallthru
    _
  // Predicated region
  $region30: #{closed_call.18} parent=0 // pred_check
    _
  $region31: #{closed_call.18} parent=0 // pred_check_branch
    %187 = sbr.rel (0) target = $region33
  $region32: #{closed_call.18} parent=0 // pred_region
    _
  $region33: #{closed_call.18} parent=0 // pred_fallthru
    _

// kernel: closed_call.19
$region0: #{closed_call.19}
  #allocation0 [shape = 'u32[]', space=smem, size = 0x4, offset = 0x4, fixed_abs, tag = 'smem constant byte address 0x4 - core index']
  #allocation1 [shape = 'u32[72,128]{1,0:T(1,128)}', space=vmem, size = 0x9000, scoped, tag = 'internal scratch']
  %s0 = inlined_call_operand.vmem [shape: bf16[16,32], index: 0, kind: input, shape index: {}]
  %s1 = inlined_call_operand.vmem [shape: bf16[32,64], index: 1, kind: input, shape index: {}]
  %s2 = inlined_call_operand.vmem [shape: f32[1,64], index: 2, kind: input, shape index: {}]
  %s3 = inlined_call_operand.vmem [shape: bf16[16,64], index: 3, kind: output, shape index: {}]
  %s4 = sld [smem:[#allocation0]]
  $region22: #{closed_call.19} parent=0
    _
  %s6 = ssub.s32 1, %s4
  %s7 = scalar_select 0, %s6, %s4
  // Predicated region
  $region2: #{closed_call.19} parent=0 // pred_check
    _
  $region3: #{closed_call.19} parent=0 // pred_check_branch
    %9 = sbr.rel (0) target = $region5
  $region4: #{closed_call.19} parent=0 // pred_region
    _
  $region5: #{closed_call.19} parent=0 // pred_fallthru
    _
  // Predicated region
  $region6: #{closed_call.19} parent=0 // pred_check
    _
  $region7: #{closed_call.19} parent=0 // pred_check_branch
    %11 = sbr.rel (0) target = $region9
  $region8: #{closed_call.19} parent=0 // pred_region
    _
  $region9: #{closed_call.19} parent=0 // pred_fallthru
    _
  // Predicated region
  $region10: #{closed_call.19} parent=0 // pred_check
    _
  $region11: #{closed_call.19} parent=0 // pred_check_branch
    %13 = sbr.rel (0) target = $region13
  $region12: #{closed_call.19} parent=0 // pred_region
    _
  $region13: #{closed_call.19} parent=0 // pred_fallthru
    _
  %v15 = vld [vmem:[%s0] sm:$0xf]
  %v16 = vld [vmem:[%s0 + $0x4] sm:$0xf]
  %v17 = vld [vmem:[%s1] sm:$0xf]
  %v18 = vld [vmem:[%s1 + $0x4] sm:$0xf]
  %v19 = vld [vmem:[%s1 + $0x8] sm:$0xf]
  %v20 = vld [vmem:[%s1 + $0xc] sm:$0xf]
  %v21 = vld [vmem:[%s2] sm:$0x1]
  %v23 = vperm.slane %v21, 0
  %v27 = vunpack.c.l.b16 %v15
  %v28 = vunpack.c.l.b16 %v16
  %v29 = vpack.c.b16 %v28, %v27
  %v34 = vunpack.c.l.b16 %v17
  %v35 = vunpack.c.l.b16 %v18
  %v36 = vunpack.c.l.b16 %v19
  %v37 = vunpack.c.l.b16 %v20
  %v38 = vpack.c.b16 %v35, %v34
  %v39 = vpack.c.b16 %v37, %v36
  %vm42 = vcmask 261120
  %v44 = vsel %vm42, %v29, 0
  %46 = vmatpush.bf16.msra.mxu0 0
  %47 = vmatpush.bf16.msra.mxu0 0
  %48 = vmatpush.bf16.msra.mxu0 0
  %49 = vmatpush.bf16.msra.mxu0 0
  %50 = vmatpush.bf16.msra.mxu0 0
  %51 = vmatpush.bf16.msra.mxu0 0
  %52 = vmatpush.bf16.msra.mxu0 %v39
  %53 = vmatpush.bf16.msra.mxu0 %v38
  %54 = vmatmul.bf16.gmra.mxu0 %v44
  %v55 = vpop.f32.mrf.mxu0
  %v56 = vadd.f32 %v23, %v55
  %v57 = vpop.f32.mrf.mxu0
  %v58 = vadd.f32 %v23, %v57
  %59 = vdwg.mxu0
  %v60 = vmul.f32 %v56, %v56
  %v61 = vmul.f32 %v58, %v58
  %v62 = vmul.f32 %v56, %v60
  %v63 = vmul.f32 %v58, %v61
  %v64 = vmul.f32 %v62, 0.044715
  %v65 = vmul.f32 %v63, 0.044715
  %v66 = vadd.f32 %v56, %v64
  %v67 = vadd.f32 %v58, %v65
  %v68 = vmul.f32 %v66, 0.7978846
  %v69 = vmul.f32 %v67, 0.7978846
  %v70 = vtanh.pop %v68
  %v71 = vtanh.pop %v69
  %v72 = vadd.f32 %v70, 1.0
  %v73 = vadd.f32 %v71, 1.0
  %v74 = vmul.f32 %v72, 0.5
  %v75 = vmul.f32 %v73, 0.5
  %v76 = vmul.f32 %v56, %v74
  %v77 = vmul.f32 %v58, %v75
  %v78 = vpack.c.bf16 %v76, %v76
  %v79 = vpack.c.bf16 %v77, %v77
  %vm80 = vcmask 519168
  %81 = vst.msk [vmem:[%s3] sm:$0xf] %vm80, %v78
  %82 = vst.msk [vmem:[%s3 + $0x4] sm:$0xf] %vm80, %v79
  // Predicated region
  $region14: #{closed_call.19} parent=0 // pred_check
    _
  $region15: #{closed_call.19} parent=0 // pred_check_branch
    %84 = sbr.rel (0) target = $region17
  $region16: #{closed_call.19} parent=0 // pred_region
    _
  $region17: #{closed_call.19} parent=0 // pred_fallthru
    _
  // Predicated region
  $region18: #{closed_call.19} parent=0 // pred_check
    _
  $region19: #{closed_call.19} parent=0 // pred_check_branch
    %86 = sbr.rel (0) target = $region21
  $region20: #{closed_call.19} parent=0 // pred_region
    _
  $region21: #{closed_call.19} parent=0 // pred_fallthru
    _

// kernel: closed_call.20
$region0: #{closed_call.20}
  #allocation0 [shape = 'u32[]', space=smem, size = 0x4, offset = 0x4, fixed_abs, tag = 'smem constant byte address 0x4 - core index']
  #allocation1 [shape = 'u32[72,128]{1,0:T(1,128)}', space=vmem, size = 0x9000, scoped, tag = 'internal scratch']
  %s0 = inlined_call_operand.vmem [shape: bf16[16,64], index: 0, kind: input, shape index: {}]
  %s1 = inlined_call_operand.vmem [shape: bf16[64,32], index: 1, kind: input, shape index: {}]
  %s2 = inlined_call_operand.vmem [shape: f32[1,32], index: 2, kind: input, shape index: {}]
  %s3 = inlined_call_operand.vmem [shape: bf16[16,32], index: 3, kind: input, shape index: {}]
  %s4 = inlined_call_operand.vmem [shape: f32[1,32], index: 4, kind: input, shape index: {}]
  %s5 = inlined_call_operand.vmem [shape: f32[1,32], index: 5, kind: input, shape index: {}]
  %s6 = inlined_call_operand.vmem [shape: bf16[16,32], index: 6, kind: output, shape index: {}]
  %s7 = sld [smem:[#allocation0]]
  $region34: #{closed_call.20} parent=0
    _
  %s9 = ssub.s32 1, %s7
  %s10 = scalar_select 0, %s9, %s7
  // Predicated region
  $region2: #{closed_call.20} parent=0 // pred_check
    _
  $region3: #{closed_call.20} parent=0 // pred_check_branch
    %12 = sbr.rel (0) target = $region5
  $region4: #{closed_call.20} parent=0 // pred_region
    _
  $region5: #{closed_call.20} parent=0 // pred_fallthru
    _
  // Predicated region
  $region6: #{closed_call.20} parent=0 // pred_check
    _
  $region7: #{closed_call.20} parent=0 // pred_check_branch
    %14 = sbr.rel (0) target = $region9
  $region8: #{closed_call.20} parent=0 // pred_region
    _
  $region9: #{closed_call.20} parent=0 // pred_fallthru
    _
  // Predicated region
  $region10: #{closed_call.20} parent=0 // pred_check
    _
  $region11: #{closed_call.20} parent=0 // pred_check_branch
    %16 = sbr.rel (0) target = $region13
  $region12: #{closed_call.20} parent=0 // pred_region
    _
  $region13: #{closed_call.20} parent=0 // pred_fallthru
    _
  // Predicated region
  $region14: #{closed_call.20} parent=0 // pred_check
    _
  $region15: #{closed_call.20} parent=0 // pred_check_branch
    %18 = sbr.rel (0) target = $region17
  $region16: #{closed_call.20} parent=0 // pred_region
    _
  $region17: #{closed_call.20} parent=0 // pred_fallthru
    _
  // Predicated region
  $region18: #{closed_call.20} parent=0 // pred_check
    _
  $region19: #{closed_call.20} parent=0 // pred_check_branch
    %20 = sbr.rel (0) target = $region21
  $region20: #{closed_call.20} parent=0 // pred_region
    _
  $region21: #{closed_call.20} parent=0 // pred_fallthru
    _
  // Predicated region
  $region22: #{closed_call.20} parent=0 // pred_check
    _
  $region23: #{closed_call.20} parent=0 // pred_check_branch
    %22 = sbr.rel (0) target = $region25
  $region24: #{closed_call.20} parent=0 // pred_region
    _
  $region25: #{closed_call.20} parent=0 // pred_fallthru
    _
  %v24 = vld [vmem:[%s0] sm:$0xf]
  %v25 = vld [vmem:[%s0 + $0x4] sm:$0xf]
  %v26 = vld [vmem:[%s1] sm:$0xf]
  %v27 = vld [vmem:[%s1 + $0x4] sm:$0xf]
  %v28 = vld [vmem:[%s1 + $0x8] sm:$0xf]
  %v29 = vld [vmem:[%s1 + $0xc] sm:$0xf]
  %v30 = vld [vmem:[%s1 + $0x10] sm:$0xf]
  %v31 = vld [vmem:[%s1 + $0x14] sm:$0xf]
  %v32 = vld [vmem:[%s1 + $0x18] sm:$0xf]
  %v33 = vld [vmem:[%s1 + $0x1c] sm:$0xf]
  %v36 = vunpack.c.l.b16 %v24
  %v37 = vunpack.c.l.b16 %v25
  %v38 = vpack.c.b16 %v37, %v36
  %v47 = vunpack.c.l.b16 %v26
  %v48 = vunpack.c.l.b16 %v27
  %v49 = vunpack.c.l.b16 %v28
  %v50 = vunpack.c.l.b16 %v29
  %v51 = vunpack.c.l.b16 %v30
  %v52 = vunpack.c.l.b16 %v31
  %v53 = vunpack.c.l.b16 %v32
  %v54 = vunpack.c.l.b16 %v33
  %v55 = vpack.c.b16 %v48, %v47
  %v56 = vpack.c.b16 %v50, %v49
  %v57 = vpack.c.b16 %v52, %v51
  %v58 = vpack.c.b16 %v54, %v53
  %vm63 = vcmask 523264
  %v65 = vsel %vm63, %v38, 0
  %67 = vmatpush.bf16.msra.mxu0 0
  %68 = vmatpush.bf16.msra.mxu0 0
  %69 = vmatpush.bf16.msra.mxu0 0
  %70 = vmatpush.bf16.msra.mxu0 0
  %71 = vmatpush.bf16.msra.mxu0 %v58
  %72 = vmatpush.bf16.msra.mxu0 %v57
  %73 = vmatpush.bf16.msra.mxu0 %v56
  %74 = vmatpush.bf16.msra.mxu0 %v55
  %75 = vmatmul.bf16.gmra.mxu0 %v65
  %v76 = vpop.f32.mrf.mxu0
  %v77 = vadd.f32 0.0, %v76
  %v78 = vpop.f32.mrf.mxu0
  %v79 = vadd.f32 0.0, %v78
  %80 = vdwg.mxu0
  %v81 = vld [vmem:[%s3] sm:$0xf]
  %v82 = vld [vmem:[%s3 + $0x4] sm:$0xf]
  %v83 = vunpack.c.l.bf16 %v81
  %v84 = vunpack.c.l.bf16 %v82
  %v85 = vadd.f32 %v83, %v77
  %v86 = vadd.f32 %v84, %v79
  %v87 = vld [vmem:[%s2] sm:$0x1]
  %v89 = vperm.slane %v87, 0
  %v91 = vadd.f32 %v85, %v89
  %v92 = vadd.f32 %v86, %v89
  %v93 = vld [vmem:[%s4] sm:$0x1]
  %v94 = vld [vmem:[%s5] sm:$0x1]
  %vm95 = vcmask 261120
  %v96 = vsel %vm95, %v91, 0.0
  %97 = vadd.xlane.f32.xlu0 %v96
  %v98 = vpop.xlane.xlu0 %97
  %v99 = vsel %vm95, %v92, 0.0
  %100 = vadd.xlane.f32.xlu0 %v99
  %v101 = vpop.xlane.xlu0 %100
  %v102 = vrcp.pop 32.0
  %v103 = vmul.f32 32.0, %v102
  %v104 = vsub.f32 1.0, %v103
  %v105 = vmul.f32 %v102, %v104
  %v106 = vadd.f32 %v102, %v105
  %vm107 = vweird.f32 %v102
  %v108 = vsel %vm107, %v102, %v106
  %v109 = vmul.f32 %v98, %v108
  %v110 = vmul.f32 %v101, %v108
  %v111 = vsub.f32 %v91, %v109
  %v112 = vsub.f32 %v92, %v110
  %v113 = vmul.f32 %v111, %v111
  %v114 = vmul.f32 %v112, %v112
  %v115 = vsel %vm95, %v113, 0.0
  %116 = vadd.xlane.f32.xlu0 %v115
  %v117 = vpop.xlane.xlu0 %116
  %v118 = vsel %vm95, %v114, 0.0
  %119 = vadd.xlane.f32.xlu0 %v118
  %v120 = vpop.xlane.xlu0 %119
  %v121 = vrcp.pop 31.0
  %v122 = vmul.f32 31.0, %v121
  %v123 = vsub.f32 1.0, %v122
  %v124 = vmul.f32 %v121, %v123
  %v125 = vadd.f32 %v121, %v124
  %vm126 = vweird.f32 %v121
  %v127 = vsel %vm126, %v121, %v125
  %v128 = vmul.f32 %v117, %v127
  %v129 = vmul.f32 %v120, %v127
  %v131 = vperm.slane %v93, 0
  %v133 = vmul.f32 %v131, %v111
  %v134 = vmul.f32 %v131, %v112
  %v135 = vrsqrt.pop %v128
  %v136 = vmul.f32 %v135, %v128
  %v137 = vmul.f32 %v136, %v135
  %v138 = vmul.f32 0.5, %v137
  %v139 = vsub.f32 1.5, %v138
  %v140 = vmul.f32 %v135, %v139
  %v141 = vmul.f32 %v128, %v140
  %vm142 = vcmp.eq.f32.partialorder %v128, inf
  %v143 = vsel %vm142, %v128, %v141
  %vm144 = vcmp.eq.f32.partialorder %v128, 0.0
  %v145 = vand.u32 %v128, 2147483648
  %v146 = vsel %vm144, %v145, %v143
  %v147 = vrsqrt.pop %v129
  %v148 = vmul.f32 %v147, %v129
  %v149 = vmul.f32 %v148, %v147
  %v150 = vmul.f32 0.5, %v149
  %v151 = vsub.f32 1.5, %v150
  %v152 = vmul.f32 %v147, %v151
  %v153 = vmul.f32 %v129, %v152
  %vm154 = vcmp.eq.f32.partialorder %v129, inf
  %v155 = vsel %vm154, %v129, %v153
  %vm156 = vcmp.eq.f32.partialorder %v129, 0.0
  %v157 = vand.u32 %v129, 2147483648
  %v158 = vsel %vm156, %v157, %v155
  %v159 = vadd.f32 %v146, 1e-06
  %v160 = vadd.f32 %v158, 1e-06
  %v161 = vrcp.pop %v159
  %v162 = vmul.f32 %v159, %v161
  %v163 = vsub.f32 1.0, %v162
  %v164 = vmul.f32 %v161, %v163
  %v165 = vadd.f32 %v161, %v164
  %vm166 = vweird.f32 %v159
  %vm167 = vweird.f32 %v161
  %vm168 = vmor %vm166, %vm167
  %v169 = vsel %vm168, %v161, %v165
  %v170 = vand.u32 2147483647, %v159
  %vm171 = vcmp.eq.f32.partialorder %v170, 8.507059e+37
  %v172 = vand.u32 %v159, 2147483648
  %v173 = vor.u32 1.1754944e-38, %v172
  %v174 = vsel %vm171, %v173, %v169
  %v175 = vmul.f32 %v133, %v174
  %v176 = vrcp.pop %v160
  %v177 = vmul.f32 %v160, %v176
  %v178 = vsub.f32 1.0, %v177
  %v179 = vmul.f32 %v176, %v178
  %v180 = vadd.f32 %v176, %v179
  %vm181 = vweird.f32 %v160
  %vm182 = vweird.f32 %v176
  %vm183 = vmor %vm181, %vm182
  %v184 = vsel %vm183, %v176, %v180
  %v185 = vand.u32 2147483647, %v160
  %vm186 = vcmp.eq.f32.partialorder %v185, 8.507059e+37
  %v187 = vand.u32 %v160, 2147483648
  %v188 = vor.u32 1.1754944e-38, %v187
  %v189 = vsel %vm186, %v188, %v184
  %v190 = vmul.f32 %v134, %v189
  %v192 = vperm.slane %v94, 0
  %v194 = vadd.f32 %v175, %v192
  %v195 = vadd.f32 %v190, %v192
  %v196 = vpack.c.bf16 %v194, %v194
  %v197 = vpack.c.bf16 %v195, %v195
  %vm198 = vcmask 257024
  %199 = vst.msk [vmem:[%s6] sm:$0xf] %vm198, %v196
  %200 = vst.msk [vmem:[%s6 + $0x4] sm:$0xf] %vm198, %v197
  // Predicated region
  $region26: #{closed_call.20} parent=0 // pred_check
    _
  $region27: #{closed_call.20} parent=0 // pred_check_branch
    %202 = sbr.rel (0) target = $region29
  $region28: #{closed_call.20} parent=0 // pred_region
    _
  $region29: #{closed_call.20} parent=0 // pred_fallthru
    _
  // Predicated region
  $region30: #{closed_call.20} parent=0 // pred_check
    _
  $region31: #{closed_call.20} parent=0 // pred_check_branch
    %204 = sbr.rel (0) target = $region33
  $region32: #{closed_call.20} parent=0 // pred_region
    _
  $region33: #{closed_call.20} parent=0 // pred_fallthru
    _

</llo_original>
